<compile_context>
chip_gen: v6e
topology: v6e:2x2x1
jax: 0.10.0
libtpu: 0.0.40
codegen_flags: <defaults>
</compile_context>

<pallas_src>
import functools

import jax
import jax.numpy as jnp
from jax.experimental import pallas as pl
from jax.experimental.pallas import tpu as pltpu

_VMEM_LIMIT = 32 * 1024 * 1024  # safe on v5e/v6e (128 MiB) and v7x (64 MiB)


# ------------------------------- Pallas kernel -------------------------------

def _channel_gate_kernel(x_ref, w1_ref, b1_ref, w2_ref, b2_ref, o_ref, *, inv_hw):
    # x_ref: (C, HW) for the current batch element
    x = x_ref[...].astype(jnp.float32)

    # Global avg / max pooling over the spatial (lane) axis.
    mx = jnp.max(x, axis=-1, keepdims=True)            # (C, 1)
    avg = jnp.sum(x, axis=-1, keepdims=True) * inv_hw  # (C, 1)

    # Stack both pooled vectors so the shared MLP runs once: pooled is (C, 2).
    pooled = jnp.concatenate([avg, mx], axis=-1)        # (C, 2)

    # MLP: Linear(C -> C/r) -> ReLU -> Linear(C/r -> C), applied to both columns.
    # Weights are in PyTorch layout (out_features, in_features) so no transposes needed.
    h = jnp.dot(w1_ref[...], pooled, preferred_element_type=jnp.float32) + b1_ref[...]  # (C/r, 2)
    h = jnp.maximum(h, 0.0)
    att = jnp.dot(w2_ref[...], h, preferred_element_type=jnp.float32) + b2_ref[...]     # (C, 2)

    # channel_att_sum = mlp(avg) + mlp(max); sigmoid; broadcast-scale x.
    att_sum = att[:, 0:1] + att[:, 1:2]                 # (C, 1)
    scale = jax.nn.sigmoid(att_sum)                     # (C, 1), f32 (EUP exp + recip)
    o_ref[...] = (x * scale).astype(o_ref.dtype)


# --------------------------------- wrapper -----------------------------------

def channel_gate(x, w1, b1, w2, b2):
    """ChannelGate forward.

    x : [B, C, H, W]
    w1: [C//r, C]   b1: [C//r]     (first Linear, PyTorch layout)
    w2: [C, C//r]   b2: [C]        (second Linear, PyTorch layout)
    """
    B, C, H, W = x.shape
    HW = H * W
    Cr = w1.shape[0]

    x3 = x.reshape(B, C, HW)
    out = pl.pallas_call(
        functools.partial(_channel_gate_kernel, inv_hw=1.0 / float(HW)),
        out_shape=jax.ShapeDtypeStruct((B, C, HW), x.dtype),
        grid=(B,),
        in_specs=[
            pl.BlockSpec((None, C, HW), lambda b: (b, 0, 0)),   # x: one batch row per step
            pl.BlockSpec((Cr, C), lambda b: (0, 0)),            # w1 (resident)
            pl.BlockSpec((Cr, 1), lambda b: (0, 0)),            # b1
            pl.BlockSpec((C, Cr), lambda b: (0, 0)),            # w2
            pl.BlockSpec((C, 1), lambda b: (0, 0)),             # b2
        ],
        out_specs=pl.BlockSpec((None, C, HW), lambda b: (b, 0, 0)),
        compiler_params=pltpu.CompilerParams(
            dimension_semantics=("parallel",),      # batch rows shard across v7x's 2 TCs
            vmem_limit_bytes=_VMEM_LIMIT,
        ),
    )(
        x3,
        w1.astype(jnp.float32),
        b1.reshape(Cr, 1).astype(jnp.float32),
        w2.astype(jnp.float32),
        b2.reshape(C, 1).astype(jnp.float32),
    )
    return out.reshape(B, C, H, W)


# --------------------------- pure-JAX reference ------------------------------

def channel_gate_ref(x, w1, b1, w2, b2):
    avg = jnp.mean(x, axis=(2, 3))
    mx = jnp.max(x, axis=(2, 3))

    def mlp(v):
        h = jnp.maximum(v @ w1.T + b1, 0.0)
        return h @ w2.T + b2

    att = mlp(avg) + mlp(mx)
    scale = jax.nn.sigmoid(att)[:, :, None, None]
    return x * scale


# ----------------------------------- main ------------------------------------

if __name__ == "__main__":
    key = jax.random.PRNGKey(0)
    kx, k1, k2, k3, k4 = jax.random.split(key, 5)

    # Shapes implied by the surrounding model: gate_channels=256, 14x14 feature map,
    # reduction_ratio=16 (so the hidden width is 16), batch=2.
    B, C, H, W = 2, 256, 14, 14
    r = 16

    x = jax.random.normal(kx, (B, C, H, W), jnp.float32)
    w1 = jax.random.normal(k1, (C // r, C), jnp.float32) * 0.05
    b1 = jax.random.normal(k2, (C // r,), jnp.float32) * 0.01
    w2 = jax.random.normal(k3, (C, C // r), jnp.float32) * 0.05
    b2 = jax.random.normal(k4, (C,), jnp.float32) * 0.01

    fwd = jax.jit(channel_gate)
    out = fwd(x, w1, b1, w2, b2)
    jax.block_until_ready(out)

    ref = channel_gate_ref(x, w1, b1, w2, b2)

    assert out.shape == (B, C, H, W)
    assert bool(jnp.all(jnp.isfinite(out)))
    assert bool(jnp.allclose(out, ref, atol=1e-4, rtol=1e-4))
    print("KERNEL_OK")
</pallas_src>

<mosaic_0001>
module attributes {stable_mosaic.version = 11 : i64} {
  func.func @_channel_gate_kernel(%arg0: i32, %arg1: memref<1x256x196xf32, #tpu.memory_space<vmem>>, %arg2: memref<16x256xf32, #tpu.memory_space<vmem>>, %arg3: memref<16x1xf32, #tpu.memory_space<vmem>>, %arg4: memref<256x16xf32, #tpu.memory_space<vmem>>, %arg5: memref<256x1xf32, #tpu.memory_space<vmem>>, %arg6: memref<1x256x196xf32, #tpu.memory_space<vmem>>) attributes {dimension_semantics = [#tpu.dimension_semantics<parallel>], iteration_bounds = array<i64: 2>, scalar_prefetch = 0 : i64, scratch_operands = 0 : i64, tpu.core_type = #tpu.core_type<tc>, window_params = [{transform_indices = @transform_0, window_bounds = array<i64: 1, 256, 196>}, {pipeline_mode = #tpu.pipeline_mode<synchronous>, transform_indices = @transform_1, window_bounds = array<i64: 16, 256>}, {pipeline_mode = #tpu.pipeline_mode<synchronous>, transform_indices = @transform_2, window_bounds = array<i64: 16, 1>}, {pipeline_mode = #tpu.pipeline_mode<synchronous>, transform_indices = @transform_3, window_bounds = array<i64: 256, 16>}, {pipeline_mode = #tpu.pipeline_mode<synchronous>, transform_indices = @transform_4, window_bounds = array<i64: 256, 1>}, {transform_indices = @transform_5, window_bounds = array<i64: 1, 256, 196>}]} {
    %c0 = arith.constant 0 : index
    %c0_0 = arith.constant 0 : index
    %c0_1 = arith.constant 0 : index
    %0 = vector.load %arg1[%c0, %c0_0, %c0_1] : memref<1x256x196xf32, #tpu.memory_space<vmem>>, vector<1x256x196xf32>
    %1 = vector.shape_cast %0 : vector<1x256x196xf32> to vector<256x196xf32>
    %cst = arith.constant dense<0xFF800000> : vector<256xf32>
    %2 = vector.multi_reduction <maximumf>, %1, %cst [1] : vector<256x196xf32> to vector<256xf32>
    %3 = vector.shape_cast %2 : vector<256xf32> to vector<256x1xf32>
    %cst_2 = arith.constant dense<0.000000e+00> : vector<256xf32>
    %4 = vector.multi_reduction <add>, %1, %cst_2 [1] : vector<256x196xf32> to vector<256xf32>
    %5 = vector.shape_cast %4 : vector<256xf32> to vector<256x1xf32>
    %cst_3 = arith.constant 0.00510204071 : f32
    %6 = vector.broadcast %cst_3 : f32 to vector<256x1xf32>
    %7 = arith.mulf %5, %6 : vector<256x1xf32>
    %8 = tpu.concatenate %7, %3 in 1 : vector<256x1xf32>, vector<256x1xf32> -> vector<256x2xf32>
    %c0_4 = arith.constant 0 : index
    %c0_5 = arith.constant 0 : index
    %9 = vector.load %arg2[%c0_4, %c0_5] : memref<16x256xf32, #tpu.memory_space<vmem>>, vector<16x256xf32>
    %cst_6 = arith.constant dense<0.000000e+00> : vector<16x2xf32>
    %10 = tpu.matmul %9, %8, %cst_6 {dimension_numbers = #tpu.dot_dimension_numbers<[1], [0], [0], [1], [0, 0, 1, 1], [], []>} : vector<16x256xf32>, vector<256x2xf32>, vector<16x2xf32> -> vector<16x2xf32>
    %c0_7 = arith.constant 0 : index
    %c0_8 = arith.constant 0 : index
    %11 = vector.load %arg3[%c0_7, %c0_8] : memref<16x1xf32, #tpu.memory_space<vmem>>, vector<16x1xf32>
    %12 = vector.broadcast %11 : vector<16x1xf32> to vector<16x2xf32>
    %13 = arith.addf %10, %12 : vector<16x2xf32>
    %cst_9 = arith.constant 0.000000e+00 : f32
    %14 = vector.broadcast %cst_9 : f32 to vector<16x2xf32>
    %15 = arith.maximumf %13, %14 : vector<16x2xf32>
    %c0_10 = arith.constant 0 : index
    %c0_11 = arith.constant 0 : index
    %16 = vector.load %arg4[%c0_10, %c0_11] : memref<256x16xf32, #tpu.memory_space<vmem>>, vector<256x16xf32>
    %cst_12 = arith.constant dense<0.000000e+00> : vector<256x2xf32>
    %17 = tpu.matmul %16, %15, %cst_12 {dimension_numbers = #tpu.dot_dimension_numbers<[1], [0], [0], [1], [0, 0, 1, 1], [], []>} : vector<256x16xf32>, vector<16x2xf32>, vector<256x2xf32> -> vector<256x2xf32>
    %c0_13 = arith.constant 0 : index
    %c0_14 = arith.constant 0 : index
    %18 = vector.load %arg5[%c0_13, %c0_14] : memref<256x1xf32, #tpu.memory_space<vmem>>, vector<256x1xf32>
    %19 = vector.broadcast %18 : vector<256x1xf32> to vector<256x2xf32>
    %20 = arith.addf %17, %19 : vector<256x2xf32>
    %21 = vector.extract_strided_slice %20 {offsets = [0, 0], sizes = [256, 1], strides = [1, 1]} : vector<256x2xf32> to vector<256x1xf32>
    %22 = vector.extract_strided_slice %20 {offsets = [0, 1], sizes = [256, 1], strides = [1, 1]} : vector<256x2xf32> to vector<256x1xf32>
    %23 = arith.addf %21, %22 : vector<256x1xf32>
    %24 = arith.negf %23 : vector<256x1xf32>
    %25 = math.exp %24 : vector<256x1xf32>
    %cst_15 = arith.constant 1.000000e+00 : f32
    %26 = vector.broadcast %cst_15 : f32 to vector<256x1xf32>
    %27 = arith.addf %26, %25 : vector<256x1xf32>
    %28 = arith.divf %26, %27 : vector<256x1xf32>
    %29 = vector.broadcast %28 : vector<256x1xf32> to vector<256x196xf32>
    %30 = arith.mulf %1, %29 : vector<256x196xf32>
    %c0_16 = arith.constant 0 : index
    %c0_17 = arith.constant 0 : index
    %c0_18 = arith.constant 0 : index
    %31 = vector.load %arg6[%c0_16, %c0_17, %c0_18] : memref<1x256x196xf32, #tpu.memory_space<vmem>>, vector<1x256x196xf32>
    %32 = vector.shape_cast %31 : vector<1x256x196xf32> to vector<256x196xf32>
    %33 = vector.shape_cast %30 : vector<256x196xf32> to vector<1x256x196xf32>
    tpu.vector_store %arg6[%c0_16, %c0_17, %c0_18], %33 {strides = array<i32>} : memref<1x256x196xf32, #tpu.memory_space<vmem>>, vector<1x256x196xf32>,
    return
  }
  func.func @transform_0(%arg0: i32) -> (i32, i32, i32) {
    %c0_i32 = arith.constant 0 : i32
    %c0_i32_0 = arith.constant 0 : i32
    %c0_i32_1 = arith.constant 0 : i32
    return %arg0, %c0_i32, %c0_i32_0 : i32, i32, i32
  }
  func.func @transform_1(%arg0: i32) -> (i32, i32) {
    %c0_i32 = arith.constant 0 : i32
    %c0_i32_0 = arith.constant 0 : i32
    %c0_i32_1 = arith.constant 0 : i32
    return %c0_i32, %c0_i32_0 : i32, i32
  }
  func.func @transform_2(%arg0: i32) -> (i32, i32) {
    %c0_i32 = arith.constant 0 : i32
    %c0_i32_0 = arith.constant 0 : i32
    %c0_i32_1 = arith.constant 0 : i32
    return %c0_i32, %c0_i32_0 : i32, i32
  }
  func.func @transform_3(%arg0: i32) -> (i32, i32) {
    %c0_i32 = arith.constant 0 : i32
    %c0_i32_0 = arith.constant 0 : i32
    %c0_i32_1 = arith.constant 0 : i32
    return %c0_i32, %c0_i32_0 : i32, i32
  }
  func.func @transform_4(%arg0: i32) -> (i32, i32) {
    %c0_i32 = arith.constant 0 : i32
    %c0_i32_0 = arith.constant 0 : i32
    %c0_i32_1 = arith.constant 0 : i32
    return %c0_i32, %c0_i32_0 : i32, i32
  }
  func.func @transform_5(%arg0: i32) -> (i32, i32, i32) {
    %c0_i32 = arith.constant 0 : i32
    %c0_i32_0 = arith.constant 0 : i32
    %c0_i32_1 = arith.constant 0 : i32
    return %arg0, %c0_i32, %c0_i32_0 : i32, i32, i32
  }
}

</mosaic_0001>

<llo_original>
// kernel: channel_gate.1
$region0: #{channel_gate.1}
  #allocation0 [shape = 'u32[]', space=smem, size = 0x4, offset = 0x4, fixed_abs, tag = 'smem constant byte address 0x4 - core index']
  #allocation1 [shape = 'u32[144,128]{1,0:T(1,128)}', space=vmem, size = 0x12000, scoped, tag = 'internal scratch']
  %s0 = inlined_call_operand.vmem [shape: f32[2,256,196], index: 0, kind: input, shape index: {}]
  %s1 = inlined_call_operand.vmem [shape: f32[16,256], index: 1, kind: input, shape index: {}]
  %s2 = inlined_call_operand.vmem [shape: f32[16,1], index: 2, kind: input, shape index: {}]
  %s3 = inlined_call_operand.vmem [shape: f32[256,16], index: 3, kind: input, shape index: {}]
  %s4 = inlined_call_operand.vmem [shape: f32[256,1], index: 4, kind: input, shape index: {}]
  %s5 = inlined_call_operand.vmem [shape: f32[2,256,196], index: 5, kind: output, shape index: {}]
  %s6 = sld [smem:[#allocation0]]
  $region53: #{channel_gate.1} parent=0
    _
  %s8 = ssub.s32 1, %s6
  %s9 = scalar_select 0, %s8, %s6
  loop: start=0, step=1, limit=4
  $region2: #{channel_gate.1} parent=0 // loop_pre_header
    _
  $region3: #{channel_gate.1} parent=0 // loop_header
    %s11 = sphi 0, %s15
    %p12 = scmp.ge.s32.totalorder %s11, 4
    %s21 = sphi 0, %s23
    %s24 = sphi 0, %s21
    %s25 = sphi 0, %s24
    %s41 = sphi 0, %s25
    %s45 = sphi 0, %s45
    %s47 = sphi 0, %s45
    %s48 = sphi 0, %s47
    %s62 = sphi 0, %s48
    %s66 = sphi 0, %s66
    %s68 = sphi 0, %s66
    %s69 = sphi 0, %s68
    %s83 = sphi 0, %s69
    %s87 = sphi 0, %s87
    %s89 = sphi 0, %s87
    %s90 = sphi 0, %s89
    %s104 = sphi 0, %s90
    %s108 = sphi 0, %s108
    %s110 = sphi 0, %s108
    %s111 = sphi 0, %s110
    %s125 = sphi 0, %s111
    %s131 = sphi 0, %s133
    %s134 = sphi 0, %s131
    %s135 = sphi 0, %s134
    %s151 = sphi 0, %s135
  $region4: #{channel_gate.1} parent=0 // loop_header_branch
    %14 = sbr.rel (%p12) target = $region8
  $region5: #{channel_gate.1} parent=0 // loop_body
    %s16 = ssub.s32 %s11, 1
    %s17 = ssub.s32 %s11, 2
    %s18 = sadd.s32 %s11, 1
    %s19 = ssub.s32 %s11, %s18
    %p20 = scmp.eq.s32.totalorder %s19, 0
    %s22 = sadd.s32 %s21, 1
    %s23 = scalar_select %p20, %s21, %s22
    %p26 = pneg %p20
    %p27 = scmp.eq.s32.totalorder %s11, 1
    %p28 = por %p26, %p27
    %p29 = scmp.ne.s32.totalorder %s21, %s24
    %p30 = scmp.eq.s32.totalorder %s11, 0
    %p31 = por %p29, %p30
    %p32 = scmp.ne.s32.totalorder %s21, %s24
    %p33 = scmp.eq.s32.totalorder %s16, 1
    %p34 = por %p32, %p33
    %p35 = scmp.ne.s32.totalorder %s24, %s25
    %p36 = scmp.eq.s32.totalorder %s16, 0
    %p37 = por %p35, %p36
    %p38 = scmp.ne.s32.totalorder %s24, %s25
    %p39 = scmp.eq.s32.totalorder %s17, 1
    %p40 = por %p38, %p39
    %p42 = scmp.ne.s32.totalorder %s25, %s41
    %p43 = scmp.eq.s32.totalorder %s17, 0
    %p44 = por %p42, %p43
    %s46 = sadd.s32 %s45, 1
    %p49 = scmp.eq.s32.totalorder %s11, 1
    %p50 = scmp.ne.s32.totalorder %s45, %s47
    %p51 = scmp.eq.s32.totalorder %s11, 0
    %p52 = por %p50, %p51
    %p53 = scmp.ne.s32.totalorder %s45, %s47
    %p54 = scmp.eq.s32.totalorder %s16, 1
    %p55 = por %p53, %p54
    %p56 = scmp.ne.s32.totalorder %s47, %s48
    %p57 = scmp.eq.s32.totalorder %s16, 0
    %p58 = por %p56, %p57
    %p59 = scmp.ne.s32.totalorder %s47, %s48
    %p60 = scmp.eq.s32.totalorder %s17, 1
    %p61 = por %p59, %p60
    %p63 = scmp.ne.s32.totalorder %s48, %s62
    %p64 = scmp.eq.s32.totalorder %s17, 0
    %p65 = por %p63, %p64
    %s67 = sadd.s32 %s66, 1
    %p70 = scmp.eq.s32.totalorder %s11, 1
    %p71 = scmp.ne.s32.totalorder %s66, %s68
    %p72 = scmp.eq.s32.totalorder %s11, 0
    %p73 = por %p71, %p72
    %p74 = scmp.ne.s32.totalorder %s66, %s68
    %p75 = scmp.eq.s32.totalorder %s16, 1
    %p76 = por %p74, %p75
    %p77 = scmp.ne.s32.totalorder %s68, %s69
    %p78 = scmp.eq.s32.totalorder %s16, 0
    %p79 = por %p77, %p78
    %p80 = scmp.ne.s32.totalorder %s68, %s69
    %p81 = scmp.eq.s32.totalorder %s17, 1
    %p82 = por %p80, %p81
    %p84 = scmp.ne.s32.totalorder %s69, %s83
    %p85 = scmp.eq.s32.totalorder %s17, 0
    %p86 = por %p84, %p85
    %s88 = sadd.s32 %s87, 1
    %p91 = scmp.eq.s32.totalorder %s11, 1
    %p92 = scmp.ne.s32.totalorder %s87, %s89
    %p93 = scmp.eq.s32.totalorder %s11, 0
    %p94 = por %p92, %p93
    %p95 = scmp.ne.s32.totalorder %s87, %s89
    %p96 = scmp.eq.s32.totalorder %s16, 1
    %p97 = por %p95, %p96
    %p98 = scmp.ne.s32.totalorder %s89, %s90
    %p99 = scmp.eq.s32.totalorder %s16, 0
    %p100 = por %p98, %p99
    %p101 = scmp.ne.s32.totalorder %s89, %s90
    %p102 = scmp.eq.s32.totalorder %s17, 1
    %p103 = por %p101, %p102
    %p105 = scmp.ne.s32.totalorder %s90, %s104
    %p106 = scmp.eq.s32.totalorder %s17, 0
    %p107 = por %p105, %p106
    %s109 = sadd.s32 %s108, 1
    %p112 = scmp.eq.s32.totalorder %s11, 1
    %p113 = scmp.ne.s32.totalorder %s108, %s110
    %p114 = scmp.eq.s32.totalorder %s11, 0
    %p115 = por %p113, %p114
    %p116 = scmp.ne.s32.totalorder %s108, %s110
    %p117 = scmp.eq.s32.totalorder %s16, 1
    %p118 = por %p116, %p117
    %p119 = scmp.ne.s32.totalorder %s110, %s111
    %p120 = scmp.eq.s32.totalorder %s16, 0
    %p121 = por %p119, %p120
    %p122 = scmp.ne.s32.totalorder %s110, %s111
    %p123 = scmp.eq.s32.totalorder %s17, 1
    %p124 = por %p122, %p123
    %p126 = scmp.ne.s32.totalorder %s111, %s125
    %p127 = scmp.eq.s32.totalorder %s17, 0
    %p128 = por %p126, %p127
    %s129 = ssub.s32 %s11, %s18
    %p130 = scmp.eq.s32.totalorder %s129, 0
    %s132 = sadd.s32 %s131, 1
    %s133 = scalar_select %p130, %s131, %s132
    %p136 = pneg %p130
    %p137 = scmp.eq.s32.totalorder %s11, 1
    %p138 = por %p136, %p137
    %p139 = scmp.ne.s32.totalorder %s131, %s134
    %p140 = scmp.eq.s32.totalorder %s11, 0
    %p141 = por %p139, %p140
    %p142 = scmp.ne.s32.totalorder %s131, %s134
    %p143 = scmp.eq.s32.totalorder %s16, 1
    %p144 = por %p142, %p143
    %p145 = scmp.ne.s32.totalorder %s134, %s135
    %p146 = scmp.eq.s32.totalorder %s16, 0
    %p147 = por %p145, %p146
    %p148 = scmp.ne.s32.totalorder %s134, %s135
    %p149 = scmp.eq.s32.totalorder %s17, 1
    %p150 = por %p148, %p149
    %p152 = scmp.ne.s32.totalorder %s135, %s151
    %p153 = scmp.eq.s32.totalorder %s17, 0
    %p154 = por %p152, %p153
    %p155 = scmp.le.s32.totalorder 1, %s11
    %p156 = scmp.lt.s32.totalorder %s11, 3
    %p157 = pnand %p155, %p156
    %p158 = pneg %p157
    // Predicated region
    $region9: #{channel_gate.1} parent=5 // pred_check
      _
    $region10: #{channel_gate.1} parent=5 // pred_check_branch
      %160 = sbr.rel (%p157) target = $region12
    $region11: #{channel_gate.1} parent=5 // pred_region
      %s161 = ssub.s32 %s11, 1
      // Predicated region
      $region13: #{channel_gate.1} parent=11 // pred_check
        %p162 = pneg %p58
      $region14: #{channel_gate.1} parent=11 // pred_check_branch
        %164 = sbr.rel (%p162) target = $region16
      $region15: #{channel_gate.1} parent=11 // pred_region
        _
      $region16: #{channel_gate.1} parent=11 // pred_fallthru
        _
      // Predicated region
      $region17: #{channel_gate.1} parent=11 // pred_check
        %p165 = pneg %p79
      $region18: #{channel_gate.1} parent=11 // pred_check_branch
        %167 = sbr.rel (%p165) target = $region20
      $region19: #{channel_gate.1} parent=11 // pred_region
        _
      $region20: #{channel_gate.1} parent=11 // pred_fallthru
        _
      // Predicated region
      $region21: #{channel_gate.1} parent=11 // pred_check
        %p168 = pneg %p100
      $region22: #{channel_gate.1} parent=11 // pred_check_branch
        %170 = sbr.rel (%p168) target = $region24
      $region23: #{channel_gate.1} parent=11 // pred_region
        _
      $region24: #{channel_gate.1} parent=11 // pred_fallthru
        _
      // Predicated region
      $region25: #{channel_gate.1} parent=11 // pred_check
        %p171 = pneg %p121
      $region26: #{channel_gate.1} parent=11 // pred_check_branch
        %173 = sbr.rel (%p171) target = $region28
      $region27: #{channel_gate.1} parent=11 // pred_region
        _
      $region28: #{channel_gate.1} parent=11 // pred_fallthru
        _
    $region12: #{channel_gate.1} parent=5 // pred_fallthru
      _
    %p174 = scmp.lt.s32.totalorder %s11, 2
    // Predicated region
    $region29: #{channel_gate.1} parent=5 // pred_check
      %p175 = pneg %p174
    $region30: #{channel_gate.1} parent=5 // pred_check_branch
      %177 = sbr.rel (%p175) target = $region32
    $region31: #{channel_gate.1} parent=5 // pred_region
      // Predicated region
      $region33: #{channel_gate.1} parent=31 // pred_check
        %p178 = pneg %p31
      $region34: #{channel_gate.1} parent=31 // pred_check_branch
        %180 = sbr.rel (%p178) target = $region36
      $region35: #{channel_gate.1} parent=31 // pred_region
        %p181 = scmp.lt.s32.totalorder %s11, 1
        %s182 = scalar_select %p181, %s11, 1
        %s183 = smul.addr %s182, 64
        %s184 = smul.addr %s183, 8
        %s185 = scalar_lea.vmem %s0, %s184
      $region36: #{channel_gate.1} parent=31 // pred_fallthru
        _
    $region32: #{channel_gate.1} parent=5 // pred_fallthru
      _
    %p186 = scmp.le.s32.totalorder 1, %s11
    %p187 = scmp.lt.s32.totalorder %s11, 3
    %p188 = pnand %p186, %p187
    %p189 = pneg %p188
    // Predicated region
    $region37: #{channel_gate.1} parent=5 // pred_check
      _
    $region38: #{channel_gate.1} parent=5 // pred_check_branch
      %191 = sbr.rel (%p188) target = $region40
    $region39: #{channel_gate.1} parent=5 // pred_region
      %s192 = ssub.s32 %s11, 1
      %p193 = scmp.lt.s32.totalorder %s16, 1
      %s194 = scalar_select %p193, %s16, 1
      %s195 = smul.addr %s194, 64
      %s196 = smul.addr %s195, 8
      %s197 = scalar_lea.vmem %s0, %s196
      %p198 = pneg %p37
      %p199 = pneg %p34
      %p200 = pneg %p58
      %p201 = pneg %p55
      %p202 = pneg %p79
      %p203 = pneg %p76
      %p204 = pneg %p100
      %p205 = pneg %p97
      %p206 = pneg %p121
      %p207 = pneg %p118
      %p208 = pneg %p147
      %p209 = pneg %p144
      %p210 = scmp.lt.s32.totalorder %s16, 1
      %s211 = scalar_select %p210, %s16, 1
      %s212 = smul.addr %s211, 64
      %s213 = smul.addr %s212, 8
      %s214 = scalar_lea.vmem %s5, %s213
      %p215 = scmp.lt.s32.totalorder %s16, 1
      %s216 = scalar_select %p215, %s16, 1
      %s217 = smul.addr %s216, 64
      %s218 = smul.addr %s217, 8
      %s219 = scalar_lea.vmem %s0, %s218
      %p220 = scmp.lt.s32.totalorder %s16, 1
      %s221 = scalar_select %p220, %s16, 1
      %s222 = smul.addr %s221, 64
      %s223 = smul.addr %s222, 8
      %s224 = scalar_lea.vmem %s5, %s223
      %v225 = vld [vmem:[%s219] sm:$0xff]
      %v226 = vld [vmem:[%s219 + $0x8] sm:$0xff]
      %v227 = vld [vmem:[%s219 + $0x10] sm:$0xff]
      %v228 = vld [vmem:[%s219 + $0x18] sm:$0xff]
      %v229 = vld [vmem:[%s219 + $0x20] sm:$0xff]
      %v230 = vld [vmem:[%s219 + $0x28] sm:$0xff]
      %v231 = vld [vmem:[%s219 + $0x30] sm:$0xff]
      %v232 = vld [vmem:[%s219 + $0x38] sm:$0xff]
      %v233 = vld [vmem:[%s219 + $0x40] sm:$0xff]
      %v234 = vld [vmem:[%s219 + $0x48] sm:$0xff]
      %v235 = vld [vmem:[%s219 + $0x50] sm:$0xff]
      %v236 = vld [vmem:[%s219 + $0x58] sm:$0xff]
      %v237 = vld [vmem:[%s219 + $0x60] sm:$0xff]
      %v238 = vld [vmem:[%s219 + $0x68] sm:$0xff]
      %v239 = vld [vmem:[%s219 + $0x70] sm:$0xff]
      %v240 = vld [vmem:[%s219 + $0x78] sm:$0xff]
      %v241 = vld [vmem:[%s219 + $0x80] sm:$0xff]
      %v242 = vld [vmem:[%s219 + $0x88] sm:$0xff]
      %v243 = vld [vmem:[%s219 + $0x90] sm:$0xff]
      %v244 = vld [vmem:[%s219 + $0x98] sm:$0xff]
      %v245 = vld [vmem:[%s219 + $0xa0] sm:$0xff]
      %v246 = vld [vmem:[%s219 + $0xa8] sm:$0xff]
      %v247 = vld [vmem:[%s219 + $0xb0] sm:$0xff]
      %v248 = vld [vmem:[%s219 + $0xb8] sm:$0xff]
      %v249 = vld [vmem:[%s219 + $0xc0] sm:$0xff]
      %v250 = vld [vmem:[%s219 + $0xc8] sm:$0xff]
      %v251 = vld [vmem:[%s219 + $0xd0] sm:$0xff]
      %v252 = vld [vmem:[%s219 + $0xd8] sm:$0xff]
      %v253 = vld [vmem:[%s219 + $0xe0] sm:$0xff]
      %v254 = vld [vmem:[%s219 + $0xe8] sm:$0xff]
      %v255 = vld [vmem:[%s219 + $0xf0] sm:$0xff]
      %v256 = vld [vmem:[%s219 + $0xf8] sm:$0xff]
      %v257 = vld [vmem:[%s219 + $0x100] sm:$0xff]
      %v258 = vld [vmem:[%s219 + $0x108] sm:$0xff]
      %v259 = vld [vmem:[%s219 + $0x110] sm:$0xff]
      %v260 = vld [vmem:[%s219 + $0x118] sm:$0xff]
      %v261 = vld [vmem:[%s219 + $0x120] sm:$0xff]
      %v262 = vld [vmem:[%s219 + $0x128] sm:$0xff]
      %v263 = vld [vmem:[%s219 + $0x130] sm:$0xff]
      %v264 = vld [vmem:[%s219 + $0x138] sm:$0xff]
      %v265 = vld [vmem:[%s219 + $0x140] sm:$0xff]
      %v266 = vld [vmem:[%s219 + $0x148] sm:$0xff]
      %v267 = vld [vmem:[%s219 + $0x150] sm:$0xff]
      %v268 = vld [vmem:[%s219 + $0x158] sm:$0xff]
      %v269 = vld [vmem:[%s219 + $0x160] sm:$0xff]
      %v270 = vld [vmem:[%s219 + $0x168] sm:$0xff]
      %v271 = vld [vmem:[%s219 + $0x170] sm:$0xff]
      %v272 = vld [vmem:[%s219 + $0x178] sm:$0xff]
      %v273 = vld [vmem:[%s219 + $0x180] sm:$0xff]
      %v274 = vld [vmem:[%s219 + $0x188] sm:$0xff]
      %v275 = vld [vmem:[%s219 + $0x190] sm:$0xff]
      %v276 = vld [vmem:[%s219 + $0x198] sm:$0xff]
      %v277 = vld [vmem:[%s219 + $0x1a0] sm:$0xff]
      %v278 = vld [vmem:[%s219 + $0x1a8] sm:$0xff]
      %v279 = vld [vmem:[%s219 + $0x1b0] sm:$0xff]
      %v280 = vld [vmem:[%s219 + $0x1b8] sm:$0xff]
      %v281 = vld [vmem:[%s219 + $0x1c0] sm:$0xff]
      %v282 = vld [vmem:[%s219 + $0x1c8] sm:$0xff]
      %v283 = vld [vmem:[%s219 + $0x1d0] sm:$0xff]
      %v284 = vld [vmem:[%s219 + $0x1d8] sm:$0xff]
      %v285 = vld [vmem:[%s219 + $0x1e0] sm:$0xff]
      %v286 = vld [vmem:[%s219 + $0x1e8] sm:$0xff]
      %v287 = vld [vmem:[%s219 + $0x1f0] sm:$0xff]
      %v288 = vld [vmem:[%s219 + $0x1f8] sm:$0xff]
      %vm289 = vcmask 556032
      %v290 = vsel %vm289, %v226, -inf
      %v291 = vmax.f32 %v225, %v290
      %292 = vmax.xlane.f32.xlu0 %v291
      %v293 = vpop.xlane.xlu0 %292
      %v294 = vsel %vm289, %v228, -inf
      %v295 = vmax.f32 %v227, %v294
      %296 = vmax.xlane.f32.xlu0 %v295
      %v297 = vpop.xlane.xlu0 %296
      %v298 = vsel %vm289, %v230, -inf
      %v299 = vmax.f32 %v229, %v298
      %300 = vmax.xlane.f32.xlu0 %v299
      %v301 = vpop.xlane.xlu0 %300
      %v302 = vsel %vm289, %v232, -inf
      %v303 = vmax.f32 %v231, %v302
      %304 = vmax.xlane.f32.xlu0 %v303
      %v305 = vpop.xlane.xlu0 %304
      %v306 = vsel %vm289, %v234, -inf
      %v307 = vmax.f32 %v233, %v306
      %308 = vmax.xlane.f32.xlu0 %v307
      %v309 = vpop.xlane.xlu0 %308
      %v310 = vsel %vm289, %v236, -inf
      %v311 = vmax.f32 %v235, %v310
      %312 = vmax.xlane.f32.xlu0 %v311
      %v313 = vpop.xlane.xlu0 %312
      %v314 = vsel %vm289, %v238, -inf
      %v315 = vmax.f32 %v237, %v314
      %316 = vmax.xlane.f32.xlu0 %v315
      %v317 = vpop.xlane.xlu0 %316
      %v318 = vsel %vm289, %v240, -inf
      %v319 = vmax.f32 %v239, %v318
      %320 = vmax.xlane.f32.xlu0 %v319
      %v321 = vpop.xlane.xlu0 %320
      %v322 = vsel %vm289, %v242, -inf
      %v323 = vmax.f32 %v241, %v322
      %324 = vmax.xlane.f32.xlu0 %v323
      %v325 = vpop.xlane.xlu0 %324
      %v326 = vsel %vm289, %v244, -inf
      %v327 = vmax.f32 %v243, %v326
      %328 = vmax.xlane.f32.xlu0 %v327
      %v329 = vpop.xlane.xlu0 %328
      %v330 = vsel %vm289, %v246, -inf
      %v331 = vmax.f32 %v245, %v330
      %332 = vmax.xlane.f32.xlu0 %v331
      %v333 = vpop.xlane.xlu0 %332
      %v334 = vsel %vm289, %v248, -inf
      %v335 = vmax.f32 %v247, %v334
      %336 = vmax.xlane.f32.xlu0 %v335
      %v337 = vpop.xlane.xlu0 %336
      %v338 = vsel %vm289, %v250, -inf
      %v339 = vmax.f32 %v249, %v338
      %340 = vmax.xlane.f32.xlu0 %v339
      %v341 = vpop.xlane.xlu0 %340
      %v342 = vsel %vm289, %v252, -inf
      %v343 = vmax.f32 %v251, %v342
      %344 = vmax.xlane.f32.xlu0 %v343
      %v345 = vpop.xlane.xlu0 %344
      %v346 = vsel %vm289, %v254, -inf
      %v347 = vmax.f32 %v253, %v346
      %348 = vmax.xlane.f32.xlu0 %v347
      %v349 = vpop.xlane.xlu0 %348
      %v350 = vsel %vm289, %v256, -inf
      %v351 = vmax.f32 %v255, %v350
      %352 = vmax.xlane.f32.xlu0 %v351
      %v353 = vpop.xlane.xlu0 %352
      %v354 = vsel %vm289, %v258, -inf
      %v355 = vmax.f32 %v257, %v354
      %356 = vmax.xlane.f32.xlu0 %v355
      %v357 = vpop.xlane.xlu0 %356
      %v358 = vsel %vm289, %v260, -inf
      %v359 = vmax.f32 %v259, %v358
      %360 = vmax.xlane.f32.xlu0 %v359
      %v361 = vpop.xlane.xlu0 %360
      %v362 = vsel %vm289, %v262, -inf
      %v363 = vmax.f32 %v261, %v362
      %364 = vmax.xlane.f32.xlu0 %v363
      %v365 = vpop.xlane.xlu0 %364
      %v366 = vsel %vm289, %v264, -inf
      %v367 = vmax.f32 %v263, %v366
      %368 = vmax.xlane.f32.xlu0 %v367
      %v369 = vpop.xlane.xlu0 %368
      %v370 = vsel %vm289, %v266, -inf
      %v371 = vmax.f32 %v265, %v370
      %372 = vmax.xlane.f32.xlu0 %v371
      %v373 = vpop.xlane.xlu0 %372
      %v374 = vsel %vm289, %v268, -inf
      %v375 = vmax.f32 %v267, %v374
      %376 = vmax.xlane.f32.xlu0 %v375
      %v377 = vpop.xlane.xlu0 %376
      %v378 = vsel %vm289, %v270, -inf
      %v379 = vmax.f32 %v269, %v378
      %380 = vmax.xlane.f32.xlu0 %v379
      %v381 = vpop.xlane.xlu0 %380
      %v382 = vsel %vm289, %v272, -inf
      %v383 = vmax.f32 %v271, %v382
      %384 = vmax.xlane.f32.xlu0 %v383
      %v385 = vpop.xlane.xlu0 %384
      %v386 = vsel %vm289, %v274, -inf
      %v387 = vmax.f32 %v273, %v386
      %388 = vmax.xlane.f32.xlu0 %v387
      %v389 = vpop.xlane.xlu0 %388
      %v390 = vsel %vm289, %v276, -inf
      %v391 = vmax.f32 %v275, %v390
      %392 = vmax.xlane.f32.xlu0 %v391
      %v393 = vpop.xlane.xlu0 %392
      %v394 = vsel %vm289, %v278, -inf
      %v395 = vmax.f32 %v277, %v394
      %396 = vmax.xlane.f32.xlu0 %v395
      %v397 = vpop.xlane.xlu0 %396
      %v398 = vsel %vm289, %v280, -inf
      %v399 = vmax.f32 %v279, %v398
      %400 = vmax.xlane.f32.xlu0 %v399
      %v401 = vpop.xlane.xlu0 %400
      %v402 = vsel %vm289, %v282, -inf
      %v403 = vmax.f32 %v281, %v402
      %404 = vmax.xlane.f32.xlu0 %v403
      %v405 = vpop.xlane.xlu0 %404
      %v406 = vsel %vm289, %v284, -inf
      %v407 = vmax.f32 %v283, %v406
      %408 = vmax.xlane.f32.xlu0 %v407
      %v409 = vpop.xlane.xlu0 %408
      %v410 = vsel %vm289, %v286, -inf
      %v411 = vmax.f32 %v285, %v410
      %412 = vmax.xlane.f32.xlu0 %v411
      %v413 = vpop.xlane.xlu0 %412
      %v414 = vsel %vm289, %v288, -inf
      %v415 = vmax.f32 %v287, %v414
      %416 = vmax.xlane.f32.xlu0 %v415
      %v417 = vpop.xlane.xlu0 %416
      %v418 = vsel %vm289, %v226, 0.0
      %v419 = vadd.f32 %v225, %v418
      %420 = vadd.xlane.f32.xlu0 %v419
      %v421 = vpop.xlane.xlu0 %420
      %v422 = vsel %vm289, %v228, 0.0
      %v423 = vadd.f32 %v227, %v422
      %424 = vadd.xlane.f32.xlu0 %v423
      %v425 = vpop.xlane.xlu0 %424
      %v426 = vsel %vm289, %v230, 0.0
      %v427 = vadd.f32 %v229, %v426
      %428 = vadd.xlane.f32.xlu0 %v427
      %v429 = vpop.xlane.xlu0 %428
      %v430 = vsel %vm289, %v232, 0.0
      %v431 = vadd.f32 %v231, %v430
      %432 = vadd.xlane.f32.xlu0 %v431
      %v433 = vpop.xlane.xlu0 %432
      %v434 = vsel %vm289, %v234, 0.0
      %v435 = vadd.f32 %v233, %v434
      %436 = vadd.xlane.f32.xlu0 %v435
      %v437 = vpop.xlane.xlu0 %436
      %v438 = vsel %vm289, %v236, 0.0
      %v439 = vadd.f32 %v235, %v438
      %440 = vadd.xlane.f32.xlu0 %v439
      %v441 = vpop.xlane.xlu0 %440
      %v442 = vsel %vm289, %v238, 0.0
      %v443 = vadd.f32 %v237, %v442
      %444 = vadd.xlane.f32.xlu0 %v443
      %v445 = vpop.xlane.xlu0 %444
      %v446 = vsel %vm289, %v240, 0.0
      %v447 = vadd.f32 %v239, %v446
      %448 = vadd.xlane.f32.xlu0 %v447
      %v449 = vpop.xlane.xlu0 %448
      %v450 = vsel %vm289, %v242, 0.0
      %v451 = vadd.f32 %v241, %v450
      %452 = vadd.xlane.f32.xlu0 %v451
      %v453 = vpop.xlane.xlu0 %452
      %v454 = vsel %vm289, %v244, 0.0
      %v455 = vadd.f32 %v243, %v454
      %456 = vadd.xlane.f32.xlu0 %v455
      %v457 = vpop.xlane.xlu0 %456
      %v458 = vsel %vm289, %v246, 0.0
      %v459 = vadd.f32 %v245, %v458
      %460 = vadd.xlane.f32.xlu0 %v459
      %v461 = vpop.xlane.xlu0 %460
      %v462 = vsel %vm289, %v248, 0.0
      %v463 = vadd.f32 %v247, %v462
      %464 = vadd.xlane.f32.xlu0 %v463
      %v465 = vpop.xlane.xlu0 %464
      %v466 = vsel %vm289, %v250, 0.0
      %v467 = vadd.f32 %v249, %v466
      %468 = vadd.xlane.f32.xlu0 %v467
      %v469 = vpop.xlane.xlu0 %468
      %v470 = vsel %vm289, %v252, 0.0
      %v471 = vadd.f32 %v251, %v470
      %472 = vadd.xlane.f32.xlu0 %v471
      %v473 = vpop.xlane.xlu0 %472
      %v474 = vsel %vm289, %v254, 0.0
      %v475 = vadd.f32 %v253, %v474
      %476 = vadd.xlane.f32.xlu0 %v475
      %v477 = vpop.xlane.xlu0 %476
      %v478 = vsel %vm289, %v256, 0.0
      %v479 = vadd.f32 %v255, %v478
      %480 = vadd.xlane.f32.xlu0 %v479
      %v481 = vpop.xlane.xlu0 %480
      %v482 = vsel %vm289, %v258, 0.0
      %v483 = vadd.f32 %v257, %v482
      %484 = vadd.xlane.f32.xlu0 %v483
      %v485 = vpop.xlane.xlu0 %484
      %v486 = vsel %vm289, %v260, 0.0
      %v487 = vadd.f32 %v259, %v486
      %488 = vadd.xlane.f32.xlu0 %v487
      %v489 = vpop.xlane.xlu0 %488
      %v490 = vsel %vm289, %v262, 0.0
      %v491 = vadd.f32 %v261, %v490
      %492 = vadd.xlane.f32.xlu0 %v491
      %v493 = vpop.xlane.xlu0 %492
      %v494 = vsel %vm289, %v264, 0.0
      %v495 = vadd.f32 %v263, %v494
      %496 = vadd.xlane.f32.xlu0 %v495
      %v497 = vpop.xlane.xlu0 %496
      %v498 = vsel %vm289, %v266, 0.0
      %v499 = vadd.f32 %v265, %v498
      %500 = vadd.xlane.f32.xlu0 %v499
      %v501 = vpop.xlane.xlu0 %500
      %v502 = vsel %vm289, %v268, 0.0
      %v503 = vadd.f32 %v267, %v502
      %504 = vadd.xlane.f32.xlu0 %v503
      %v505 = vpop.xlane.xlu0 %504
      %v506 = vsel %vm289, %v270, 0.0
      %v507 = vadd.f32 %v269, %v506
      %508 = vadd.xlane.f32.xlu0 %v507
      %v509 = vpop.xlane.xlu0 %508
      %v510 = vsel %vm289, %v272, 0.0
      %v511 = vadd.f32 %v271, %v510
      %512 = vadd.xlane.f32.xlu0 %v511
      %v513 = vpop.xlane.xlu0 %512
      %v514 = vsel %vm289, %v274, 0.0
      %v515 = vadd.f32 %v273, %v514
      %516 = vadd.xlane.f32.xlu0 %v515
      %v517 = vpop.xlane.xlu0 %516
      %v518 = vsel %vm289, %v276, 0.0
      %v519 = vadd.f32 %v275, %v518
      %520 = vadd.xlane.f32.xlu0 %v519
      %v521 = vpop.xlane.xlu0 %520
      %v522 = vsel %vm289, %v278, 0.0
      %v523 = vadd.f32 %v277, %v522
      %524 = vadd.xlane.f32.xlu0 %v523
      %v525 = vpop.xlane.xlu0 %524
      %v526 = vsel %vm289, %v280, 0.0
      %v527 = vadd.f32 %v279, %v526
      %528 = vadd.xlane.f32.xlu0 %v527
      %v529 = vpop.xlane.xlu0 %528
      %v530 = vsel %vm289, %v282, 0.0
      %v531 = vadd.f32 %v281, %v530
      %532 = vadd.xlane.f32.xlu0 %v531
      %v533 = vpop.xlane.xlu0 %532
      %v534 = vsel %vm289, %v284, 0.0
      %v535 = vadd.f32 %v283, %v534
      %536 = vadd.xlane.f32.xlu0 %v535
      %v537 = vpop.xlane.xlu0 %536
      %v538 = vsel %vm289, %v286, 0.0
      %v539 = vadd.f32 %v285, %v538
      %540 = vadd.xlane.f32.xlu0 %v539
      %v541 = vpop.xlane.xlu0 %540
      %v542 = vsel %vm289, %v288, 0.0
      %v543 = vadd.f32 %v287, %v542
      %544 = vadd.xlane.f32.xlu0 %v543
      %v545 = vpop.xlane.xlu0 %544
      %v546 = vmul.f32 %v421, 0.0051020407
      %v547 = vmul.f32 %v425, 0.0051020407
      %v548 = vmul.f32 %v429, 0.0051020407
      %v549 = vmul.f32 %v433, 0.0051020407
      %v550 = vmul.f32 %v437, 0.0051020407
      %v551 = vmul.f32 %v441, 0.0051020407
      %v552 = vmul.f32 %v445, 0.0051020407
      %v553 = vmul.f32 %v449, 0.0051020407
      %v554 = vmul.f32 %v453, 0.0051020407
      %v555 = vmul.f32 %v457, 0.0051020407
      %v556 = vmul.f32 %v461, 0.0051020407
      %v557 = vmul.f32 %v465, 0.0051020407
      %v558 = vmul.f32 %v469, 0.0051020407
      %v559 = vmul.f32 %v473, 0.0051020407
      %v560 = vmul.f32 %v477, 0.0051020407
      %v561 = vmul.f32 %v481, 0.0051020407
      %v562 = vmul.f32 %v485, 0.0051020407
      %v563 = vmul.f32 %v489, 0.0051020407
      %v564 = vmul.f32 %v493, 0.0051020407
      %v565 = vmul.f32 %v497, 0.0051020407
      %v566 = vmul.f32 %v501, 0.0051020407
      %v567 = vmul.f32 %v505, 0.0051020407
      %v568 = vmul.f32 %v509, 0.0051020407
      %v569 = vmul.f32 %v513, 0.0051020407
      %v570 = vmul.f32 %v517, 0.0051020407
      %v571 = vmul.f32 %v521, 0.0051020407
      %v572 = vmul.f32 %v525, 0.0051020407
      %v573 = vmul.f32 %v529, 0.0051020407
      %v574 = vmul.f32 %v533, 0.0051020407
      %v575 = vmul.f32 %v537, 0.0051020407
      %v576 = vmul.f32 %v541, 0.0051020407
      %v577 = vmul.f32 %v545, 0.0051020407
      %vm578 = vcmask 7168
      %v579 = vsel %vm578, %v546, %v293
      %v580 = vsel %vm578, %v547, %v297
      %v581 = vsel %vm578, %v548, %v301
      %v582 = vsel %vm578, %v549, %v305
      %v583 = vsel %vm578, %v550, %v309
      %v584 = vsel %vm578, %v551, %v313
      %v585 = vsel %vm578, %v552, %v317
      %v586 = vsel %vm578, %v553, %v321
      %v587 = vsel %vm578, %v554, %v325
      %v588 = vsel %vm578, %v555, %v329
      %v589 = vsel %vm578, %v556, %v333
      %v590 = vsel %vm578, %v557, %v337
      %v591 = vsel %vm578, %v558, %v341
      %v592 = vsel %vm578, %v559, %v345
      %v593 = vsel %vm578, %v560, %v349
      %v594 = vsel %vm578, %v561, %v353
      %v595 = vsel %vm578, %v562, %v357
      %v596 = vsel %vm578, %v563, %v361
      %v597 = vsel %vm578, %v564, %v365
      %v598 = vsel %vm578, %v565, %v369
      %v599 = vsel %vm578, %v566, %v373
      %v600 = vsel %vm578, %v567, %v377
      %v601 = vsel %vm578, %v568, %v381
      %v602 = vsel %vm578, %v569, %v385
      %v603 = vsel %vm578, %v570, %v389
      %v604 = vsel %vm578, %v571, %v393
      %v605 = vsel %vm578, %v572, %v397
      %v606 = vsel %vm578, %v573, %v401
      %v607 = vsel %vm578, %v574, %v405
      %v608 = vsel %vm578, %v575, %v409
      %v609 = vsel %vm578, %v576, %v413
      %v610 = vsel %vm578, %v577, %v417
      %v611 = vld [vmem:[%s1] sm:$0xff]
      %v612 = vld [vmem:[%s1 + $0x8] sm:$0xff]
      %v613 = vld [vmem:[%s1 + $0x10] sm:$0xff]
      %v614 = vld [vmem:[%s1 + $0x18] sm:$0xff]
      %v615 = vld [vmem:[%s2] sm:$0xff]
      %v616 = vld [vmem:[%s2 + $0x8] sm:$0xff]
      %618 = vset.pattern.permute.xlu0 0
      %619 = vperm.xlu0 %618, %v615
      %v620 = vpop.permute.xlu0 %619
      %623 = vset.pattern.permute.xlu0 0
      %624 = vperm.xlu0 %623, %v616
      %v625 = vpop.permute.xlu0 %624
      %627 = vmatprep.subr.mxu0 0.0
      %628 = vmatpush1.msra.mxu0 %v594
      %629 = vmatprep.subr.mxu0 0.0
      %630 = vmatpush1.msra.mxu0 %v593
      %631 = vmatprep.subr.mxu0 0.0
      %632 = vmatpush1.msra.mxu0 %v592
      %633 = vmatprep.subr.mxu0 0.0
      %634 = vmatpush1.msra.mxu0 %v591
      %635 = vmatprep.subr.mxu0 0.0
      %636 = vmatpush1.msra.mxu0 %v590
      %637 = vmatprep.subr.mxu0 0.0
      %638 = vmatpush1.msra.mxu0 %v589
      %639 = vmatprep.subr.mxu0 0.0
      %640 = vmatpush1.msra.mxu0 %v588
      %641 = vmatprep.subr.mxu0 0.0
      %642 = vmatpush1.msra.mxu0 %v587
      %643 = vmatprep.subr.mxu0 0.0
      %644 = vmatpush1.msra.mxu0 %v586
      %645 = vmatprep.subr.mxu0 0.0
      %646 = vmatpush1.msra.mxu0 %v585
      %647 = vmatprep.subr.mxu0 0.0
      %648 = vmatpush1.msra.mxu0 %v584
      %649 = vmatprep.subr.mxu0 0.0
      %650 = vmatpush1.msra.mxu0 %v583
      %651 = vmatprep.subr.mxu0 0.0
      %652 = vmatpush1.msra.mxu0 %v582
      %653 = vmatprep.subr.mxu0 0.0
      %654 = vmatpush1.msra.mxu0 %v581
      %655 = vmatprep.subr.mxu0 0.0
      %656 = vmatpush1.msra.mxu0 %v580
      %657 = vmatprep.subr.mxu0 0.0
      %658 = vmatpush1.msra.mxu0 %v579
      %659 = vmatprep.subr.mxu0 0.0
      %660 = vmatpush2.msra.mxu0 %v610
      %661 = vmatprep.subr.mxu0 0.0
      %662 = vmatpush2.msra.mxu0 %v609
      %663 = vmatprep.subr.mxu0 0.0
      %664 = vmatpush2.msra.mxu0 %v608
      %665 = vmatprep.subr.mxu0 0.0
      %666 = vmatpush2.msra.mxu0 %v607
      %667 = vmatprep.subr.mxu0 0.0
      %668 = vmatpush2.msra.mxu0 %v606
      %669 = vmatprep.subr.mxu0 0.0
      %670 = vmatpush2.msra.mxu0 %v605
      %671 = vmatprep.subr.mxu0 0.0
      %672 = vmatpush2.msra.mxu0 %v604
      %673 = vmatprep.subr.mxu0 0.0
      %674 = vmatpush2.msra.mxu0 %v603
      %675 = vmatprep.subr.mxu0 0.0
      %676 = vmatpush2.msra.mxu0 %v602
      %677 = vmatprep.subr.mxu0 0.0
      %678 = vmatpush2.msra.mxu0 %v601
      %679 = vmatprep.subr.mxu0 0.0
      %680 = vmatpush2.msra.mxu0 %v600
      %681 = vmatprep.subr.mxu0 0.0
      %682 = vmatpush2.msra.mxu0 %v599
      %683 = vmatprep.subr.mxu0 0.0
      %684 = vmatpush2.msra.mxu0 %v598
      %685 = vmatprep.subr.mxu0 0.0
      %686 = vmatpush2.msra.mxu0 %v597
      %687 = vmatprep.subr.mxu0 0.0
      %688 = vmatpush2.msra.mxu0 %v596
      %689 = vmatprep.subr.mxu0 0.0
      %690 = vmatpush2.msra.mxu0 %v595
      %691 = vmatprep.mubr.f32.mxu0 %v612
      %692 = vmatmul.mubr.f32.gmra.mxu0 %v611
      %v693 = vpop.f32.mrf.mxu0
      %v694 = vadd.f32 %v620, %v693
      %v695 = vpop.f32.mrf.mxu0
      %696 = vmatprep.mubr.f32.mxu0 %v614
      %697 = vmatmul.mubr.f32.gmra.mxu0 %v613
      %v698 = vpop.f32.mrf.mxu0
      %v699 = vadd.f32 %v625, %v698
      %v700 = vpop.f32.mrf.mxu0
      %701 = vdwg.mxu0
      %v702 = vmax.f32 %v694, 0.0
      %v703 = vmax.f32 %v699, 0.0
      %v704 = vld [vmem:[%s3] sm:$0xff]
      %v705 = vld [vmem:[%s3 + $0x8] sm:$0xff]
      %v706 = vld [vmem:[%s3 + $0x10] sm:$0xff]
      %v707 = vld [vmem:[%s3 + $0x18] sm:$0xff]
      %v708 = vld [vmem:[%s3 + $0x20] sm:$0xff]
      %v709 = vld [vmem:[%s3 + $0x28] sm:$0xff]
      %v710 = vld [vmem:[%s3 + $0x30] sm:$0xff]
      %v711 = vld [vmem:[%s3 + $0x38] sm:$0xff]
      %v712 = vld [vmem:[%s3 + $0x40] sm:$0xff]
      %v713 = vld [vmem:[%s3 + $0x48] sm:$0xff]
      %v714 = vld [vmem:[%s3 + $0x50] sm:$0xff]
      %v715 = vld [vmem:[%s3 + $0x58] sm:$0xff]
      %v716 = vld [vmem:[%s3 + $0x60] sm:$0xff]
      %v717 = vld [vmem:[%s3 + $0x68] sm:$0xff]
      %v718 = vld [vmem:[%s3 + $0x70] sm:$0xff]
      %v719 = vld [vmem:[%s3 + $0x78] sm:$0xff]
      %v720 = vld [vmem:[%s3 + $0x80] sm:$0xff]
      %v721 = vld [vmem:[%s3 + $0x88] sm:$0xff]
      %v722 = vld [vmem:[%s3 + $0x90] sm:$0xff]
      %v723 = vld [vmem:[%s3 + $0x98] sm:$0xff]
      %v724 = vld [vmem:[%s3 + $0xa0] sm:$0xff]
      %v725 = vld [vmem:[%s3 + $0xa8] sm:$0xff]
      %v726 = vld [vmem:[%s3 + $0xb0] sm:$0xff]
      %v727 = vld [vmem:[%s3 + $0xb8] sm:$0xff]
      %v728 = vld [vmem:[%s3 + $0xc0] sm:$0xff]
      %v729 = vld [vmem:[%s3 + $0xc8] sm:$0xff]
      %v730 = vld [vmem:[%s3 + $0xd0] sm:$0xff]
      %v731 = vld [vmem:[%s3 + $0xd8] sm:$0xff]
      %v732 = vld [vmem:[%s3 + $0xe0] sm:$0xff]
      %v733 = vld [vmem:[%s3 + $0xe8] sm:$0xff]
      %v734 = vld [vmem:[%s3 + $0xf0] sm:$0xff]
      %v735 = vld [vmem:[%s3 + $0xf8] sm:$0xff]
      %v736 = vld [vmem:[%s4] sm:$0xff]
      %v737 = vld [vmem:[%s4 + $0x8] sm:$0xff]
      %v738 = vld [vmem:[%s4 + $0x10] sm:$0xff]
      %v739 = vld [vmem:[%s4 + $0x18] sm:$0xff]
      %v740 = vld [vmem:[%s4 + $0x20] sm:$0xff]
      %v741 = vld [vmem:[%s4 + $0x28] sm:$0xff]
      %v742 = vld [vmem:[%s4 + $0x30] sm:$0xff]
      %v743 = vld [vmem:[%s4 + $0x38] sm:$0xff]
      %v744 = vld [vmem:[%s4 + $0x40] sm:$0xff]
      %v745 = vld [vmem:[%s4 + $0x48] sm:$0xff]
      %v746 = vld [vmem:[%s4 + $0x50] sm:$0xff]
      %v747 = vld [vmem:[%s4 + $0x58] sm:$0xff]
      %v748 = vld [vmem:[%s4 + $0x60] sm:$0xff]
      %v749 = vld [vmem:[%s4 + $0x68] sm:$0xff]
      %v750 = vld [vmem:[%s4 + $0x70] sm:$0xff]
      %v751 = vld [vmem:[%s4 + $0x78] sm:$0xff]
      %v752 = vld [vmem:[%s4 + $0x80] sm:$0xff]
      %v753 = vld [vmem:[%s4 + $0x88] sm:$0xff]
      %v754 = vld [vmem:[%s4 + $0x90] sm:$0xff]
      %v755 = vld [vmem:[%s4 + $0x98] sm:$0xff]
      %v756 = vld [vmem:[%s4 + $0xa0] sm:$0xff]
      %v757 = vld [vmem:[%s4 + $0xa8] sm:$0xff]
      %v758 = vld [vmem:[%s4 + $0xb0] sm:$0xff]
      %v759 = vld [vmem:[%s4 + $0xb8] sm:$0xff]
      %v760 = vld [vmem:[%s4 + $0xc0] sm:$0xff]
      %v761 = vld [vmem:[%s4 + $0xc8] sm:$0xff]
      %v762 = vld [vmem:[%s4 + $0xd0] sm:$0xff]
      %v763 = vld [vmem:[%s4 + $0xd8] sm:$0xff]
      %v764 = vld [vmem:[%s4 + $0xe0] sm:$0xff]
      %v765 = vld [vmem:[%s4 + $0xe8] sm:$0xff]
      %v766 = vld [vmem:[%s4 + $0xf0] sm:$0xff]
      %v767 = vld [vmem:[%s4 + $0xf8] sm:$0xff]
      %769 = vset.pattern.permute.xlu0 0
      %770 = vperm.xlu0 %769, %v736
      %v771 = vpop.permute.xlu0 %770
      %774 = vset.pattern.permute.xlu0 0
      %775 = vperm.xlu0 %774, %v737
      %v776 = vpop.permute.xlu0 %775
      %779 = vset.pattern.permute.xlu0 0
      %780 = vperm.xlu0 %779, %v738
      %v781 = vpop.permute.xlu0 %780
      %784 = vset.pattern.permute.xlu0 0
      %785 = vperm.xlu0 %784, %v739
      %v786 = vpop.permute.xlu0 %785
      %789 = vset.pattern.permute.xlu0 0
      %790 = vperm.xlu0 %789, %v740
      %v791 = vpop.permute.xlu0 %790
      %794 = vset.pattern.permute.xlu0 0
      %795 = vperm.xlu0 %794, %v741
      %v796 = vpop.permute.xlu0 %795
      %799 = vset.pattern.permute.xlu0 0
      %800 = vperm.xlu0 %799, %v742
      %v801 = vpop.permute.xlu0 %800
      %804 = vset.pattern.permute.xlu0 0
      %805 = vperm.xlu0 %804, %v743
      %v806 = vpop.permute.xlu0 %805
      %809 = vset.pattern.permute.xlu0 0
      %810 = vperm.xlu0 %809, %v744
      %v811 = vpop.permute.xlu0 %810
      %814 = vset.pattern.permute.xlu0 0
      %815 = vperm.xlu0 %814, %v745
      %v816 = vpop.permute.xlu0 %815
      %819 = vset.pattern.permute.xlu0 0
      %820 = vperm.xlu0 %819, %v746
      %v821 = vpop.permute.xlu0 %820
      %824 = vset.pattern.permute.xlu0 0
      %825 = vperm.xlu0 %824, %v747
      %v826 = vpop.permute.xlu0 %825
      %829 = vset.pattern.permute.xlu0 0
      %830 = vperm.xlu0 %829, %v748
      %v831 = vpop.permute.xlu0 %830
      %834 = vset.pattern.permute.xlu0 0
      %835 = vperm.xlu0 %834, %v749
      %v836 = vpop.permute.xlu0 %835
      %839 = vset.pattern.permute.xlu0 0
      %840 = vperm.xlu0 %839, %v750
      %v841 = vpop.permute.xlu0 %840
      %844 = vset.pattern.permute.xlu0 0
      %845 = vperm.xlu0 %844, %v751
      %v846 = vpop.permute.xlu0 %845
      %849 = vset.pattern.permute.xlu0 0
      %850 = vperm.xlu0 %849, %v752
      %v851 = vpop.permute.xlu0 %850
      %854 = vset.pattern.permute.xlu0 0
      %855 = vperm.xlu0 %854, %v753
      %v856 = vpop.permute.xlu0 %855
      %859 = vset.pattern.permute.xlu0 0
      %860 = vperm.xlu0 %859, %v754
      %v861 = vpop.permute.xlu0 %860
      %864 = vset.pattern.permute.xlu0 0
      %865 = vperm.xlu0 %864, %v755
      %v866 = vpop.permute.xlu0 %865
      %869 = vset.pattern.permute.xlu0 0
      %870 = vperm.xlu0 %869, %v756
      %v871 = vpop.permute.xlu0 %870
      %874 = vset.pattern.permute.xlu0 0
      %875 = vperm.xlu0 %874, %v757
      %v876 = vpop.permute.xlu0 %875
      %879 = vset.pattern.permute.xlu0 0
      %880 = vperm.xlu0 %879, %v758
      %v881 = vpop.permute.xlu0 %880
      %884 = vset.pattern.permute.xlu0 0
      %885 = vperm.xlu0 %884, %v759
      %v886 = vpop.permute.xlu0 %885
      %889 = vset.pattern.permute.xlu0 0
      %890 = vperm.xlu0 %889, %v760
      %v891 = vpop.permute.xlu0 %890
      %894 = vset.pattern.permute.xlu0 0
      %895 = vperm.xlu0 %894, %v761
      %v896 = vpop.permute.xlu0 %895
      %899 = vset.pattern.permute.xlu0 0
      %900 = vperm.xlu0 %899, %v762
      %v901 = vpop.permute.xlu0 %900
      %904 = vset.pattern.permute.xlu0 0
      %905 = vperm.xlu0 %904, %v763
      %v906 = vpop.permute.xlu0 %905
      %909 = vset.pattern.permute.xlu0 0
      %910 = vperm.xlu0 %909, %v764
      %v911 = vpop.permute.xlu0 %910
      %914 = vset.pattern.permute.xlu0 0
      %915 = vperm.xlu0 %914, %v765
      %v916 = vpop.permute.xlu0 %915
      %919 = vset.pattern.permute.xlu0 0
      %920 = vperm.xlu0 %919, %v766
      %v921 = vpop.permute.xlu0 %920
      %924 = vset.pattern.permute.xlu0 0
      %925 = vperm.xlu0 %924, %v767
      %v926 = vpop.permute.xlu0 %925
      %vm928 = vcmask 130048
      %v930 = vsel %vm928, %v704, 0
      %v933 = vsel %vm928, %v705, 0
      %v936 = vsel %vm928, %v706, 0
      %v939 = vsel %vm928, %v707, 0
      %v942 = vsel %vm928, %v708, 0
      %v945 = vsel %vm928, %v709, 0
      %v948 = vsel %vm928, %v710, 0
      %v951 = vsel %vm928, %v711, 0
      %v954 = vsel %vm928, %v712, 0
      %v957 = vsel %vm928, %v713, 0
      %v960 = vsel %vm928, %v714, 0
      %v963 = vsel %vm928, %v715, 0
      %v966 = vsel %vm928, %v716, 0
      %v969 = vsel %vm928, %v717, 0
      %v972 = vsel %vm928, %v718, 0
      %v975 = vsel %vm928, %v719, 0
      %v978 = vsel %vm928, %v720, 0
      %v981 = vsel %vm928, %v721, 0
      %v984 = vsel %vm928, %v722, 0
      %v987 = vsel %vm928, %v723, 0
      %v990 = vsel %vm928, %v724, 0
      %v993 = vsel %vm928, %v725, 0
      %v996 = vsel %vm928, %v726, 0
      %v999 = vsel %vm928, %v727, 0
      %v1002 = vsel %vm928, %v728, 0
      %v1005 = vsel %vm928, %v729, 0
      %v1008 = vsel %vm928, %v730, 0
      %v1011 = vsel %vm928, %v731, 0
      %v1014 = vsel %vm928, %v732, 0
      %v1017 = vsel %vm928, %v733, 0
      %v1020 = vsel %vm928, %v734, 0
      %v1023 = vsel %vm928, %v735, 0
      %1025 = vmatprep.subr.mxu0 0.0
      %1026 = vmatpush1.msra.mxu0 0.0
      %1027 = vmatprep.subr.mxu0 0.0
      %1028 = vmatpush1.msra.mxu0 0.0
      %1029 = vmatprep.subr.mxu0 0.0
      %1030 = vmatpush1.msra.mxu0 0.0
      %1031 = vmatprep.subr.mxu0 0.0
      %1032 = vmatpush1.msra.mxu0 0.0
      %1033 = vmatprep.subr.mxu0 0.0
      %1034 = vmatpush1.msra.mxu0 0.0
      %1035 = vmatprep.subr.mxu0 0.0
      %1036 = vmatpush1.msra.mxu0 0.0
      %1037 = vmatprep.subr.mxu0 0.0
      %1038 = vmatpush1.msra.mxu0 0.0
      %1039 = vmatprep.subr.mxu0 0.0
      %1040 = vmatpush1.msra.mxu0 0.0
      %1041 = vmatprep.subr.mxu0 0.0
      %1042 = vmatpush1.msra.mxu0 0.0
      %1043 = vmatprep.subr.mxu0 0.0
      %1044 = vmatpush1.msra.mxu0 0.0
      %1045 = vmatprep.subr.mxu0 0.0
      %1046 = vmatpush1.msra.mxu0 0.0
      %1047 = vmatprep.subr.mxu0 0.0
      %1048 = vmatpush1.msra.mxu0 0.0
      %1049 = vmatprep.subr.mxu0 0.0
      %1050 = vmatpush1.msra.mxu0 0.0
      %1051 = vmatprep.subr.mxu0 0.0
      %1052 = vmatpush1.msra.mxu0 0.0
      %1053 = vmatprep.subr.mxu0 0.0
      %1054 = vmatpush1.msra.mxu0 %v703
      %1055 = vmatprep.subr.mxu0 0.0
      %1056 = vmatpush1.msra.mxu0 %v702
      %1057 = vmatprep.subr.mxu0 0.0
      %1058 = vmatpush2.msra.mxu0 0.0
      %1059 = vmatprep.subr.mxu0 0.0
      %1060 = vmatpush2.msra.mxu0 0.0
      %1061 = vmatprep.subr.mxu0 0.0
      %1062 = vmatpush2.msra.mxu0 0.0
      %1063 = vmatprep.subr.mxu0 0.0
      %1064 = vmatpush2.msra.mxu0 0.0
      %1065 = vmatprep.subr.mxu0 0.0
      %1066 = vmatpush2.msra.mxu0 0.0
      %1067 = vmatprep.subr.mxu0 0.0
      %1068 = vmatpush2.msra.mxu0 0.0
      %1069 = vmatprep.subr.mxu0 0.0
      %1070 = vmatpush2.msra.mxu0 0.0
      %1071 = vmatprep.subr.mxu0 0.0
      %1072 = vmatpush2.msra.mxu0 0.0
      %1073 = vmatprep.subr.mxu0 0.0
      %1074 = vmatpush2.msra.mxu0 0.0
      %1075 = vmatprep.subr.mxu0 0.0
      %1076 = vmatpush2.msra.mxu0 0.0
      %1077 = vmatprep.subr.mxu0 0.0
      %1078 = vmatpush2.msra.mxu0 0.0
      %1079 = vmatprep.subr.mxu0 0.0
      %1080 = vmatpush2.msra.mxu0 0.0
      %1081 = vmatprep.subr.mxu0 0.0
      %1082 = vmatpush2.msra.mxu0 0.0
      %1083 = vmatprep.subr.mxu0 0.0
      %1084 = vmatpush2.msra.mxu0 0.0
      %1085 = vmatprep.subr.mxu0 0.0
      %1086 = vmatpush2.msra.mxu0 0.0
      %1087 = vmatprep.subr.mxu0 0.0
      %1088 = vmatpush2.msra.mxu0 0.0
      %1089 = vmatprep.mubr.f32.mxu0 0.0
      %1090 = vmatmul.mubr.f32.gmra.mxu0 %v930
      %v1091 = vpop.f32.mrf.mxu0
      %v1092 = vadd.f32 %v771, %v1091
      %v1093 = vpop.f32.mrf.mxu0
      %1094 = vmatprep.mubr.f32.mxu0 0.0
      %1095 = vmatmul.mubr.f32.gmra.mxu0 %v933
      %v1096 = vpop.f32.mrf.mxu0
      %v1097 = vadd.f32 %v776, %v1096
      %v1098 = vpop.f32.mrf.mxu0
      %1099 = vmatprep.mubr.f32.mxu0 0.0
      %1100 = vmatmul.mubr.f32.gmra.mxu0 %v936
      %v1101 = vpop.f32.mrf.mxu0
      %v1102 = vadd.f32 %v781, %v1101
      %v1103 = vpop.f32.mrf.mxu0
      %1104 = vmatprep.mubr.f32.mxu0 0.0
      %1105 = vmatmul.mubr.f32.gmra.mxu0 %v939
      %v1106 = vpop.f32.mrf.mxu0
      %v1107 = vadd.f32 %v786, %v1106
      %v1108 = vpop.f32.mrf.mxu0
      %1109 = vmatprep.mubr.f32.mxu0 0.0
      %1110 = vmatmul.mubr.f32.gmra.mxu0 %v942
      %v1111 = vpop.f32.mrf.mxu0
      %v1112 = vadd.f32 %v791, %v1111
      %v1113 = vpop.f32.mrf.mxu0
      %1114 = vmatprep.mubr.f32.mxu0 0.0
      %1115 = vmatmul.mubr.f32.gmra.mxu0 %v945
      %v1116 = vpop.f32.mrf.mxu0
      %v1117 = vadd.f32 %v796, %v1116
      %v1118 = vpop.f32.mrf.mxu0
      %1119 = vmatprep.mubr.f32.mxu0 0.0
      %1120 = vmatmul.mubr.f32.gmra.mxu0 %v948
      %v1121 = vpop.f32.mrf.mxu0
      %v1122 = vadd.f32 %v801, %v1121
      %v1123 = vpop.f32.mrf.mxu0
      %1124 = vmatprep.mubr.f32.mxu0 0.0
      %1125 = vmatmul.mubr.f32.gmra.mxu0 %v951
      %v1126 = vpop.f32.mrf.mxu0
      %v1127 = vadd.f32 %v806, %v1126
      %v1128 = vpop.f32.mrf.mxu0
      %1129 = vmatprep.mubr.f32.mxu0 0.0
      %1130 = vmatmul.mubr.f32.gmra.mxu0 %v954
      %v1131 = vpop.f32.mrf.mxu0
      %v1132 = vadd.f32 %v811, %v1131
      %v1133 = vpop.f32.mrf.mxu0
      %1134 = vmatprep.mubr.f32.mxu0 0.0
      %1135 = vmatmul.mubr.f32.gmra.mxu0 %v957
      %v1136 = vpop.f32.mrf.mxu0
      %v1137 = vadd.f32 %v816, %v1136
      %v1138 = vpop.f32.mrf.mxu0
      %1139 = vmatprep.mubr.f32.mxu0 0.0
      %1140 = vmatmul.mubr.f32.gmra.mxu0 %v960
      %v1141 = vpop.f32.mrf.mxu0
      %v1142 = vadd.f32 %v821, %v1141
      %v1143 = vpop.f32.mrf.mxu0
      %1144 = vmatprep.mubr.f32.mxu0 0.0
      %1145 = vmatmul.mubr.f32.gmra.mxu0 %v963
      %v1146 = vpop.f32.mrf.mxu0
      %v1147 = vadd.f32 %v826, %v1146
      %v1148 = vpop.f32.mrf.mxu0
      %1149 = vmatprep.mubr.f32.mxu0 0.0
      %1150 = vmatmul.mubr.f32.gmra.mxu0 %v966
      %v1151 = vpop.f32.mrf.mxu0
      %v1152 = vadd.f32 %v831, %v1151
      %v1153 = vpop.f32.mrf.mxu0
      %1154 = vmatprep.mubr.f32.mxu0 0.0
      %1155 = vmatmul.mubr.f32.gmra.mxu0 %v969
      %v1156 = vpop.f32.mrf.mxu0
      %v1157 = vadd.f32 %v836, %v1156
      %v1158 = vpop.f32.mrf.mxu0
      %1159 = vmatprep.mubr.f32.mxu0 0.0
      %1160 = vmatmul.mubr.f32.gmra.mxu0 %v972
      %v1161 = vpop.f32.mrf.mxu0
      %v1162 = vadd.f32 %v841, %v1161
      %v1163 = vpop.f32.mrf.mxu0
      %1164 = vmatprep.mubr.f32.mxu0 0.0
      %1165 = vmatmul.mubr.f32.gmra.mxu0 %v975
      %v1166 = vpop.f32.mrf.mxu0
      %v1167 = vadd.f32 %v846, %v1166
      %v1168 = vpop.f32.mrf.mxu0
      %1169 = vmatprep.mubr.f32.mxu0 0.0
      %1170 = vmatmul.mubr.f32.gmra.mxu0 %v978
      %v1171 = vpop.f32.mrf.mxu0
      %v1172 = vadd.f32 %v851, %v1171
      %v1173 = vpop.f32.mrf.mxu0
      %1174 = vmatprep.mubr.f32.mxu0 0.0
      %1175 = vmatmul.mubr.f32.gmra.mxu0 %v981
      %v1176 = vpop.f32.mrf.mxu0
      %v1177 = vadd.f32 %v856, %v1176
      %v1178 = vpop.f32.mrf.mxu0
      %1179 = vmatprep.mubr.f32.mxu0 0.0
      %1180 = vmatmul.mubr.f32.gmra.mxu0 %v984
      %v1181 = vpop.f32.mrf.mxu0
      %v1182 = vadd.f32 %v861, %v1181
      %v1183 = vpop.f32.mrf.mxu0
      %1184 = vmatprep.mubr.f32.mxu0 0.0
      %1185 = vmatmul.mubr.f32.gmra.mxu0 %v987
      %v1186 = vpop.f32.mrf.mxu0
      %v1187 = vadd.f32 %v866, %v1186
      %v1188 = vpop.f32.mrf.mxu0
      %1189 = vmatprep.mubr.f32.mxu0 0.0
      %1190 = vmatmul.mubr.f32.gmra.mxu0 %v990
      %v1191 = vpop.f32.mrf.mxu0
      %v1192 = vadd.f32 %v871, %v1191
      %v1193 = vpop.f32.mrf.mxu0
      %1194 = vmatprep.mubr.f32.mxu0 0.0
      %1195 = vmatmul.mubr.f32.gmra.mxu0 %v993
      %v1196 = vpop.f32.mrf.mxu0
      %v1197 = vadd.f32 %v876, %v1196
      %v1198 = vpop.f32.mrf.mxu0
      %1199 = vmatprep.mubr.f32.mxu0 0.0
      %1200 = vmatmul.mubr.f32.gmra.mxu0 %v996
      %v1201 = vpop.f32.mrf.mxu0
      %v1202 = vadd.f32 %v881, %v1201
      %v1203 = vpop.f32.mrf.mxu0
      %1204 = vmatprep.mubr.f32.mxu0 0.0
      %1205 = vmatmul.mubr.f32.gmra.mxu0 %v999
      %v1206 = vpop.f32.mrf.mxu0
      %v1207 = vadd.f32 %v886, %v1206
      %v1208 = vpop.f32.mrf.mxu0
      %1209 = vmatprep.mubr.f32.mxu0 0.0
      %1210 = vmatmul.mubr.f32.gmra.mxu0 %v1002
      %v1211 = vpop.f32.mrf.mxu0
      %v1212 = vadd.f32 %v891, %v1211
      %v1213 = vpop.f32.mrf.mxu0
      %1214 = vmatprep.mubr.f32.mxu0 0.0
      %1215 = vmatmul.mubr.f32.gmra.mxu0 %v1005
      %v1216 = vpop.f32.mrf.mxu0
      %v1217 = vadd.f32 %v896, %v1216
      %v1218 = vpop.f32.mrf.mxu0
      %1219 = vmatprep.mubr.f32.mxu0 0.0
      %1220 = vmatmul.mubr.f32.gmra.mxu0 %v1008
      %v1221 = vpop.f32.mrf.mxu0
      %v1222 = vadd.f32 %v901, %v1221
      %v1223 = vpop.f32.mrf.mxu0
      %1224 = vmatprep.mubr.f32.mxu0 0.0
      %1225 = vmatmul.mubr.f32.gmra.mxu0 %v1011
      %v1226 = vpop.f32.mrf.mxu0
      %v1227 = vadd.f32 %v906, %v1226
      %v1228 = vpop.f32.mrf.mxu0
      %1229 = vmatprep.mubr.f32.mxu0 0.0
      %1230 = vmatmul.mubr.f32.gmra.mxu0 %v1014
      %v1231 = vpop.f32.mrf.mxu0
      %v1232 = vadd.f32 %v911, %v1231
      %v1233 = vpop.f32.mrf.mxu0
      %1234 = vmatprep.mubr.f32.mxu0 0.0
      %1235 = vmatmul.mubr.f32.gmra.mxu0 %v1017
      %v1236 = vpop.f32.mrf.mxu0
      %v1237 = vadd.f32 %v916, %v1236
      %v1238 = vpop.f32.mrf.mxu0
      %1239 = vmatprep.mubr.f32.mxu0 0.0
      %1240 = vmatmul.mubr.f32.gmra.mxu0 %v1020
      %v1241 = vpop.f32.mrf.mxu0
      %v1242 = vadd.f32 %v921, %v1241
      %v1243 = vpop.f32.mrf.mxu0
      %1244 = vmatprep.mubr.f32.mxu0 0.0
      %1245 = vmatmul.mubr.f32.gmra.mxu0 %v1023
      %v1246 = vpop.f32.mrf.mxu0
      %v1247 = vadd.f32 %v926, %v1246
      %v1248 = vpop.f32.mrf.mxu0
      %1249 = vdwg.mxu0
      %1282 = vrot.lane.b32.xlu0 %v1092, 127
      %v1283 = vpop.permute.xlu0 %1282
      %1284 = vrot.lane.b32.xlu0 %v1097, 127
      %v1285 = vpop.permute.xlu0 %1284
      %1286 = vrot.lane.b32.xlu0 %v1102, 127
      %v1287 = vpop.permute.xlu0 %1286
      %1288 = vrot.lane.b32.xlu0 %v1107, 127
      %v1289 = vpop.permute.xlu0 %1288
      %1290 = vrot.lane.b32.xlu0 %v1112, 127
      %v1291 = vpop.permute.xlu0 %1290
      %1292 = vrot.lane.b32.xlu0 %v1117, 127
      %v1293 = vpop.permute.xlu0 %1292
      %1294 = vrot.lane.b32.xlu0 %v1122, 127
      %v1295 = vpop.permute.xlu0 %1294
      %1296 = vrot.lane.b32.xlu0 %v1127, 127
      %v1297 = vpop.permute.xlu0 %1296
      %1298 = vrot.lane.b32.xlu0 %v1132, 127
      %v1299 = vpop.permute.xlu0 %1298
      %1300 = vrot.lane.b32.xlu0 %v1137, 127
      %v1301 = vpop.permute.xlu0 %1300
      %1302 = vrot.lane.b32.xlu0 %v1142, 127
      %v1303 = vpop.permute.xlu0 %1302
      %1304 = vrot.lane.b32.xlu0 %v1147, 127
      %v1305 = vpop.permute.xlu0 %1304
      %1306 = vrot.lane.b32.xlu0 %v1152, 127
      %v1307 = vpop.permute.xlu0 %1306
      %1308 = vrot.lane.b32.xlu0 %v1157, 127
      %v1309 = vpop.permute.xlu0 %1308
      %1310 = vrot.lane.b32.xlu0 %v1162, 127
      %v1311 = vpop.permute.xlu0 %1310
      %1312 = vrot.lane.b32.xlu0 %v1167, 127
      %v1313 = vpop.permute.xlu0 %1312
      %1314 = vrot.lane.b32.xlu0 %v1172, 127
      %v1315 = vpop.permute.xlu0 %1314
      %1316 = vrot.lane.b32.xlu0 %v1177, 127
      %v1317 = vpop.permute.xlu0 %1316
      %1318 = vrot.lane.b32.xlu0 %v1182, 127
      %v1319 = vpop.permute.xlu0 %1318
      %1320 = vrot.lane.b32.xlu0 %v1187, 127
      %v1321 = vpop.permute.xlu0 %1320
      %1322 = vrot.lane.b32.xlu0 %v1192, 127
      %v1323 = vpop.permute.xlu0 %1322
      %1324 = vrot.lane.b32.xlu0 %v1197, 127
      %v1325 = vpop.permute.xlu0 %1324
      %1326 = vrot.lane.b32.xlu0 %v1202, 127
      %v1327 = vpop.permute.xlu0 %1326
      %1328 = vrot.lane.b32.xlu0 %v1207, 127
      %v1329 = vpop.permute.xlu0 %1328
      %1330 = vrot.lane.b32.xlu0 %v1212, 127
      %v1331 = vpop.permute.xlu0 %1330
      %1332 = vrot.lane.b32.xlu0 %v1217, 127
      %v1333 = vpop.permute.xlu0 %1332
      %1334 = vrot.lane.b32.xlu0 %v1222, 127
      %v1335 = vpop.permute.xlu0 %1334
      %1336 = vrot.lane.b32.xlu0 %v1227, 127
      %v1337 = vpop.permute.xlu0 %1336
      %1338 = vrot.lane.b32.xlu0 %v1232, 127
      %v1339 = vpop.permute.xlu0 %1338
      %1340 = vrot.lane.b32.xlu0 %v1237, 127
      %v1341 = vpop.permute.xlu0 %1340
      %1342 = vrot.lane.b32.xlu0 %v1242, 127
      %v1343 = vpop.permute.xlu0 %1342
      %1344 = vrot.lane.b32.xlu0 %v1247, 127
      %v1345 = vpop.permute.xlu0 %1344
      %v1378 = vadd.f32 %v1092, %v1283
      %v1379 = vadd.f32 %v1097, %v1285
      %v1380 = vadd.f32 %v1102, %v1287
      %v1381 = vadd.f32 %v1107, %v1289
      %v1382 = vadd.f32 %v1112, %v1291
      %v1383 = vadd.f32 %v1117, %v1293
      %v1384 = vadd.f32 %v1122, %v1295
      %v1385 = vadd.f32 %v1127, %v1297
      %v1386 = vadd.f32 %v1132, %v1299
      %v1387 = vadd.f32 %v1137, %v1301
      %v1388 = vadd.f32 %v1142, %v1303
      %v1389 = vadd.f32 %v1147, %v1305
      %v1390 = vadd.f32 %v1152, %v1307
      %v1391 = vadd.f32 %v1157, %v1309
      %v1392 = vadd.f32 %v1162, %v1311
      %v1393 = vadd.f32 %v1167, %v1313
      %v1394 = vadd.f32 %v1172, %v1315
      %v1395 = vadd.f32 %v1177, %v1317
      %v1396 = vadd.f32 %v1182, %v1319
      %v1397 = vadd.f32 %v1187, %v1321
      %v1398 = vadd.f32 %v1192, %v1323
      %v1399 = vadd.f32 %v1197, %v1325
      %v1400 = vadd.f32 %v1202, %v1327
      %v1401 = vadd.f32 %v1207, %v1329
      %v1402 = vadd.f32 %v1212, %v1331
      %v1403 = vadd.f32 %v1217, %v1333
      %v1404 = vadd.f32 %v1222, %v1335
      %v1405 = vadd.f32 %v1227, %v1337
      %v1406 = vadd.f32 %v1232, %v1339
      %v1407 = vadd.f32 %v1237, %v1341
      %v1408 = vadd.f32 %v1242, %v1343
      %v1409 = vadd.f32 %v1247, %v1345
      %v1410 = vxor.u32 %v1378, 2147483648
      %v1411 = vxor.u32 %v1379, 2147483648
      %v1412 = vxor.u32 %v1380, 2147483648
      %v1413 = vxor.u32 %v1381, 2147483648
      %v1414 = vxor.u32 %v1382, 2147483648
      %v1415 = vxor.u32 %v1383, 2147483648
      %v1416 = vxor.u32 %v1384, 2147483648
      %v1417 = vxor.u32 %v1385, 2147483648
      %v1418 = vxor.u32 %v1386, 2147483648
      %v1419 = vxor.u32 %v1387, 2147483648
      %v1420 = vxor.u32 %v1388, 2147483648
      %v1421 = vxor.u32 %v1389, 2147483648
      %v1422 = vxor.u32 %v1390, 2147483648
      %v1423 = vxor.u32 %v1391, 2147483648
      %v1424 = vxor.u32 %v1392, 2147483648
      %v1425 = vxor.u32 %v1393, 2147483648
      %v1426 = vxor.u32 %v1394, 2147483648
      %v1427 = vxor.u32 %v1395, 2147483648
      %v1428 = vxor.u32 %v1396, 2147483648
      %v1429 = vxor.u32 %v1397, 2147483648
      %v1430 = vxor.u32 %v1398, 2147483648
      %v1431 = vxor.u32 %v1399, 2147483648
      %v1432 = vxor.u32 %v1400, 2147483648
      %v1433 = vxor.u32 %v1401, 2147483648
      %v1434 = vxor.u32 %v1402, 2147483648
      %v1435 = vxor.u32 %v1403, 2147483648
      %v1436 = vxor.u32 %v1404, 2147483648
      %v1437 = vxor.u32 %v1405, 2147483648
      %v1438 = vxor.u32 %v1406, 2147483648
      %v1439 = vxor.u32 %v1407, 2147483648
      %v1440 = vxor.u32 %v1408, 2147483648
      %v1441 = vxor.u32 %v1409, 2147483648
      %v1442 = vmul.f32 %v1410, 1.442695
      %v1443 = vpow.pop %v1442
      %v1444 = vmul.f32 %v1411, 1.442695
      %v1445 = vpow.pop %v1444
      %v1446 = vmul.f32 %v1412, 1.442695
      %v1447 = vpow.pop %v1446
      %v1448 = vmul.f32 %v1413, 1.442695
      %v1449 = vpow.pop %v1448
      %v1450 = vmul.f32 %v1414, 1.442695
      %v1451 = vpow.pop %v1450
      %v1452 = vmul.f32 %v1415, 1.442695
      %v1453 = vpow.pop %v1452
      %v1454 = vmul.f32 %v1416, 1.442695
      %v1455 = vpow.pop %v1454
      %v1456 = vmul.f32 %v1417, 1.442695
      %v1457 = vpow.pop %v1456
      %v1458 = vmul.f32 %v1418, 1.442695
      %v1459 = vpow.pop %v1458
      %v1460 = vmul.f32 %v1419, 1.442695
      %v1461 = vpow.pop %v1460
      %v1462 = vmul.f32 %v1420, 1.442695
      %v1463 = vpow.pop %v1462
      %v1464 = vmul.f32 %v1421, 1.442695
      %v1465 = vpow.pop %v1464
      %v1466 = vmul.f32 %v1422, 1.442695
      %v1467 = vpow.pop %v1466
      %v1468 = vmul.f32 %v1423, 1.442695
      %v1469 = vpow.pop %v1468
      %v1470 = vmul.f32 %v1424, 1.442695
      %v1471 = vpow.pop %v1470
      %v1472 = vmul.f32 %v1425, 1.442695
      %v1473 = vpow.pop %v1472
      %v1474 = vmul.f32 %v1426, 1.442695
      %v1475 = vpow.pop %v1474
      %v1476 = vmul.f32 %v1427, 1.442695
      %v1477 = vpow.pop %v1476
      %v1478 = vmul.f32 %v1428, 1.442695
      %v1479 = vpow.pop %v1478
      %v1480 = vmul.f32 %v1429, 1.442695
      %v1481 = vpow.pop %v1480
      %v1482 = vmul.f32 %v1430, 1.442695
      %v1483 = vpow.pop %v1482
      %v1484 = vmul.f32 %v1431, 1.442695
      %v1485 = vpow.pop %v1484
      %v1486 = vmul.f32 %v1432, 1.442695
      %v1487 = vpow.pop %v1486
      %v1488 = vmul.f32 %v1433, 1.442695
      %v1489 = vpow.pop %v1488
      %v1490 = vmul.f32 %v1434, 1.442695
      %v1491 = vpow.pop %v1490
      %v1492 = vmul.f32 %v1435, 1.442695
      %v1493 = vpow.pop %v1492
      %v1494 = vmul.f32 %v1436, 1.442695
      %v1495 = vpow.pop %v1494
      %v1496 = vmul.f32 %v1437, 1.442695
      %v1497 = vpow.pop %v1496
      %v1498 = vmul.f32 %v1438, 1.442695
      %v1499 = vpow.pop %v1498
      %v1500 = vmul.f32 %v1439, 1.442695
      %v1501 = vpow.pop %v1500
      %v1502 = vmul.f32 %v1440, 1.442695
      %v1503 = vpow.pop %v1502
      %v1504 = vmul.f32 %v1441, 1.442695
      %v1505 = vpow.pop %v1504
      %v1506 = vadd.f32 %v1443, 1.0
      %v1507 = vadd.f32 %v1445, 1.0
      %v1508 = vadd.f32 %v1447, 1.0
      %v1509 = vadd.f32 %v1449, 1.0
      %v1510 = vadd.f32 %v1451, 1.0
      %v1511 = vadd.f32 %v1453, 1.0
      %v1512 = vadd.f32 %v1455, 1.0
      %v1513 = vadd.f32 %v1457, 1.0
      %v1514 = vadd.f32 %v1459, 1.0
      %v1515 = vadd.f32 %v1461, 1.0
      %v1516 = vadd.f32 %v1463, 1.0
      %v1517 = vadd.f32 %v1465, 1.0
      %v1518 = vadd.f32 %v1467, 1.0
      %v1519 = vadd.f32 %v1469, 1.0
      %v1520 = vadd.f32 %v1471, 1.0
      %v1521 = vadd.f32 %v1473, 1.0
      %v1522 = vadd.f32 %v1475, 1.0
      %v1523 = vadd.f32 %v1477, 1.0
      %v1524 = vadd.f32 %v1479, 1.0
      %v1525 = vadd.f32 %v1481, 1.0
      %v1526 = vadd.f32 %v1483, 1.0
      %v1527 = vadd.f32 %v1485, 1.0
      %v1528 = vadd.f32 %v1487, 1.0
      %v1529 = vadd.f32 %v1489, 1.0
      %v1530 = vadd.f32 %v1491, 1.0
      %v1531 = vadd.f32 %v1493, 1.0
      %v1532 = vadd.f32 %v1495, 1.0
      %v1533 = vadd.f32 %v1497, 1.0
      %v1534 = vadd.f32 %v1499, 1.0
      %v1535 = vadd.f32 %v1501, 1.0
      %v1536 = vadd.f32 %v1503, 1.0
      %v1537 = vadd.f32 %v1505, 1.0
      %v1538 = vrcp.pop %v1506
      %v1539 = vmul.f32 1.0, %v1538
      %v1540 = vrcp.pop %v1507
      %v1541 = vmul.f32 1.0, %v1540
      %v1542 = vrcp.pop %v1508
      %v1543 = vmul.f32 1.0, %v1542
      %v1544 = vrcp.pop %v1509
      %v1545 = vmul.f32 1.0, %v1544
      %v1546 = vrcp.pop %v1510
      %v1547 = vmul.f32 1.0, %v1546
      %v1548 = vrcp.pop %v1511
      %v1549 = vmul.f32 1.0, %v1548
      %v1550 = vrcp.pop %v1512
      %v1551 = vmul.f32 1.0, %v1550
      %v1552 = vrcp.pop %v1513
      %v1553 = vmul.f32 1.0, %v1552
      %v1554 = vrcp.pop %v1514
      %v1555 = vmul.f32 1.0, %v1554
      %v1556 = vrcp.pop %v1515
      %v1557 = vmul.f32 1.0, %v1556
      %v1558 = vrcp.pop %v1516
      %v1559 = vmul.f32 1.0, %v1558
      %v1560 = vrcp.pop %v1517
      %v1561 = vmul.f32 1.0, %v1560
      %v1562 = vrcp.pop %v1518
      %v1563 = vmul.f32 1.0, %v1562
      %v1564 = vrcp.pop %v1519
      %v1565 = vmul.f32 1.0, %v1564
      %v1566 = vrcp.pop %v1520
      %v1567 = vmul.f32 1.0, %v1566
      %v1568 = vrcp.pop %v1521
      %v1569 = vmul.f32 1.0, %v1568
      %v1570 = vrcp.pop %v1522
      %v1571 = vmul.f32 1.0, %v1570
      %v1572 = vrcp.pop %v1523
      %v1573 = vmul.f32 1.0, %v1572
      %v1574 = vrcp.pop %v1524
      %v1575 = vmul.f32 1.0, %v1574
      %v1576 = vrcp.pop %v1525
      %v1577 = vmul.f32 1.0, %v1576
      %v1578 = vrcp.pop %v1526
      %v1579 = vmul.f32 1.0, %v1578
      %v1580 = vrcp.pop %v1527
      %v1581 = vmul.f32 1.0, %v1580
      %v1582 = vrcp.pop %v1528
      %v1583 = vmul.f32 1.0, %v1582
      %v1584 = vrcp.pop %v1529
      %v1585 = vmul.f32 1.0, %v1584
      %v1586 = vrcp.pop %v1530
      %v1587 = vmul.f32 1.0, %v1586
      %v1588 = vrcp.pop %v1531
      %v1589 = vmul.f32 1.0, %v1588
      %v1590 = vrcp.pop %v1532
      %v1591 = vmul.f32 1.0, %v1590
      %v1592 = vrcp.pop %v1533
      %v1593 = vmul.f32 1.0, %v1592
      %v1594 = vrcp.pop %v1534
      %v1595 = vmul.f32 1.0, %v1594
      %v1596 = vrcp.pop %v1535
      %v1597 = vmul.f32 1.0, %v1596
      %v1598 = vrcp.pop %v1536
      %v1599 = vmul.f32 1.0, %v1598
      %v1600 = vrcp.pop %v1537
      %v1601 = vmul.f32 1.0, %v1600
      %1603 = vset.pattern.permute.xlu0 0
      %1604 = vperm.xlu0 %1603, %v1539
      %v1605 = vpop.permute.xlu0 %1604
      %1608 = vset.pattern.permute.xlu0 0
      %1609 = vperm.xlu0 %1608, %v1541
      %v1610 = vpop.permute.xlu0 %1609
      %1613 = vset.pattern.permute.xlu0 0
      %1614 = vperm.xlu0 %1613, %v1543
      %v1615 = vpop.permute.xlu0 %1614
      %1618 = vset.pattern.permute.xlu0 0
      %1619 = vperm.xlu0 %1618, %v1545
      %v1620 = vpop.permute.xlu0 %1619
      %1623 = vset.pattern.permute.xlu0 0
      %1624 = vperm.xlu0 %1623, %v1547
      %v1625 = vpop.permute.xlu0 %1624
      %1628 = vset.pattern.permute.xlu0 0
      %1629 = vperm.xlu0 %1628, %v1549
      %v1630 = vpop.permute.xlu0 %1629
      %1633 = vset.pattern.permute.xlu0 0
      %1634 = vperm.xlu0 %1633, %v1551
      %v1635 = vpop.permute.xlu0 %1634
      %1638 = vset.pattern.permute.xlu0 0
      %1639 = vperm.xlu0 %1638, %v1553
      %v1640 = vpop.permute.xlu0 %1639
      %1643 = vset.pattern.permute.xlu0 0
      %1644 = vperm.xlu0 %1643, %v1555
      %v1645 = vpop.permute.xlu0 %1644
      %1648 = vset.pattern.permute.xlu0 0
      %1649 = vperm.xlu0 %1648, %v1557
      %v1650 = vpop.permute.xlu0 %1649
      %1653 = vset.pattern.permute.xlu0 0
      %1654 = vperm.xlu0 %1653, %v1559
      %v1655 = vpop.permute.xlu0 %1654
      %1658 = vset.pattern.permute.xlu0 0
      %1659 = vperm.xlu0 %1658, %v1561
      %v1660 = vpop.permute.xlu0 %1659
      %1663 = vset.pattern.permute.xlu0 0
      %1664 = vperm.xlu0 %1663, %v1563
      %v1665 = vpop.permute.xlu0 %1664
      %1668 = vset.pattern.permute.xlu0 0
      %1669 = vperm.xlu0 %1668, %v1565
      %v1670 = vpop.permute.xlu0 %1669
      %1673 = vset.pattern.permute.xlu0 0
      %1674 = vperm.xlu0 %1673, %v1567
      %v1675 = vpop.permute.xlu0 %1674
      %1678 = vset.pattern.permute.xlu0 0
      %1679 = vperm.xlu0 %1678, %v1569
      %v1680 = vpop.permute.xlu0 %1679
      %1683 = vset.pattern.permute.xlu0 0
      %1684 = vperm.xlu0 %1683, %v1571
      %v1685 = vpop.permute.xlu0 %1684
      %1688 = vset.pattern.permute.xlu0 0
      %1689 = vperm.xlu0 %1688, %v1573
      %v1690 = vpop.permute.xlu0 %1689
      %1693 = vset.pattern.permute.xlu0 0
      %1694 = vperm.xlu0 %1693, %v1575
      %v1695 = vpop.permute.xlu0 %1694
      %1698 = vset.pattern.permute.xlu0 0
      %1699 = vperm.xlu0 %1698, %v1577
      %v1700 = vpop.permute.xlu0 %1699
      %1703 = vset.pattern.permute.xlu0 0
      %1704 = vperm.xlu0 %1703, %v1579
      %v1705 = vpop.permute.xlu0 %1704
      %1708 = vset.pattern.permute.xlu0 0
      %1709 = vperm.xlu0 %1708, %v1581
      %v1710 = vpop.permute.xlu0 %1709
      %1713 = vset.pattern.permute.xlu0 0
      %1714 = vperm.xlu0 %1713, %v1583
      %v1715 = vpop.permute.xlu0 %1714
      %1718 = vset.pattern.permute.xlu0 0
      %1719 = vperm.xlu0 %1718, %v1585
      %v1720 = vpop.permute.xlu0 %1719
      %1723 = vset.pattern.permute.xlu0 0
      %1724 = vperm.xlu0 %1723, %v1587
      %v1725 = vpop.permute.xlu0 %1724
      %1728 = vset.pattern.permute.xlu0 0
      %1729 = vperm.xlu0 %1728, %v1589
      %v1730 = vpop.permute.xlu0 %1729
      %1733 = vset.pattern.permute.xlu0 0
      %1734 = vperm.xlu0 %1733, %v1591
      %v1735 = vpop.permute.xlu0 %1734
      %1738 = vset.pattern.permute.xlu0 0
      %1739 = vperm.xlu0 %1738, %v1593
      %v1740 = vpop.permute.xlu0 %1739
      %1743 = vset.pattern.permute.xlu0 0
      %1744 = vperm.xlu0 %1743, %v1595
      %v1745 = vpop.permute.xlu0 %1744
      %1748 = vset.pattern.permute.xlu0 0
      %1749 = vperm.xlu0 %1748, %v1597
      %v1750 = vpop.permute.xlu0 %1749
      %1753 = vset.pattern.permute.xlu0 0
      %1754 = vperm.xlu0 %1753, %v1599
      %v1755 = vpop.permute.xlu0 %1754
      %1758 = vset.pattern.permute.xlu0 0
      %1759 = vperm.xlu0 %1758, %v1601
      %v1760 = vpop.permute.xlu0 %1759
      %v1762 = vmul.f32 %v225, %v1605
      %v1763 = vmul.f32 %v226, %v1605
      %v1764 = vmul.f32 %v227, %v1610
      %v1765 = vmul.f32 %v228, %v1610
      %v1766 = vmul.f32 %v229, %v1615
      %v1767 = vmul.f32 %v230, %v1615
      %v1768 = vmul.f32 %v231, %v1620
      %v1769 = vmul.f32 %v232, %v1620
      %v1770 = vmul.f32 %v233, %v1625
      %v1771 = vmul.f32 %v234, %v1625
      %v1772 = vmul.f32 %v235, %v1630
      %v1773 = vmul.f32 %v236, %v1630
      %v1774 = vmul.f32 %v237, %v1635
      %v1775 = vmul.f32 %v238, %v1635
      %v1776 = vmul.f32 %v239, %v1640
      %v1777 = vmul.f32 %v240, %v1640
      %v1778 = vmul.f32 %v241, %v1645
      %v1779 = vmul.f32 %v242, %v1645
      %v1780 = vmul.f32 %v243, %v1650
      %v1781 = vmul.f32 %v244, %v1650
      %v1782 = vmul.f32 %v245, %v1655
      %v1783 = vmul.f32 %v246, %v1655
      %v1784 = vmul.f32 %v247, %v1660
      %v1785 = vmul.f32 %v248, %v1660
      %v1786 = vmul.f32 %v249, %v1665
      %v1787 = vmul.f32 %v250, %v1665
      %v1788 = vmul.f32 %v251, %v1670
      %v1789 = vmul.f32 %v252, %v1670
      %v1790 = vmul.f32 %v253, %v1675
      %v1791 = vmul.f32 %v254, %v1675
      %v1792 = vmul.f32 %v255, %v1680
      %v1793 = vmul.f32 %v256, %v1680
      %v1794 = vmul.f32 %v257, %v1685
      %v1795 = vmul.f32 %v258, %v1685
      %v1796 = vmul.f32 %v259, %v1690
      %v1797 = vmul.f32 %v260, %v1690
      %v1798 = vmul.f32 %v261, %v1695
      %v1799 = vmul.f32 %v262, %v1695
      %v1800 = vmul.f32 %v263, %v1700
      %v1801 = vmul.f32 %v264, %v1700
      %v1802 = vmul.f32 %v265, %v1705
      %v1803 = vmul.f32 %v266, %v1705
      %v1804 = vmul.f32 %v267, %v1710
      %v1805 = vmul.f32 %v268, %v1710
      %v1806 = vmul.f32 %v269, %v1715
      %v1807 = vmul.f32 %v270, %v1715
      %v1808 = vmul.f32 %v271, %v1720
      %v1809 = vmul.f32 %v272, %v1720
      %v1810 = vmul.f32 %v273, %v1725
      %v1811 = vmul.f32 %v274, %v1725
      %v1812 = vmul.f32 %v275, %v1730
      %v1813 = vmul.f32 %v276, %v1730
      %v1814 = vmul.f32 %v277, %v1735
      %v1815 = vmul.f32 %v278, %v1735
      %v1816 = vmul.f32 %v279, %v1740
      %v1817 = vmul.f32 %v280, %v1740
      %v1818 = vmul.f32 %v281, %v1745
      %v1819 = vmul.f32 %v282, %v1745
      %v1820 = vmul.f32 %v283, %v1750
      %v1821 = vmul.f32 %v284, %v1750
      %v1822 = vmul.f32 %v285, %v1755
      %v1823 = vmul.f32 %v286, %v1755
      %v1824 = vmul.f32 %v287, %v1760
      %v1825 = vmul.f32 %v288, %v1760
      %1826 = vst [vmem:[%s224] sm:$0xff] %v1762
      %1827 = vst.msk [vmem:[%s224 + $0x8] sm:$0xff] %vm289, %v1763
      %1828 = vst [vmem:[%s224 + $0x10] sm:$0xff] %v1764
      %1829 = vst.msk [vmem:[%s224 + $0x18] sm:$0xff] %vm289, %v1765
      %1830 = vst [vmem:[%s224 + $0x20] sm:$0xff] %v1766
      %1831 = vst.msk [vmem:[%s224 + $0x28] sm:$0xff] %vm289, %v1767
      %1832 = vst [vmem:[%s224 + $0x30] sm:$0xff] %v1768
      %1833 = vst.msk [vmem:[%s224 + $0x38] sm:$0xff] %vm289, %v1769
      %1834 = vst [vmem:[%s224 + $0x40] sm:$0xff] %v1770
      %1835 = vst.msk [vmem:[%s224 + $0x48] sm:$0xff] %vm289, %v1771
      %1836 = vst [vmem:[%s224 + $0x50] sm:$0xff] %v1772
      %1837 = vst.msk [vmem:[%s224 + $0x58] sm:$0xff] %vm289, %v1773
      %1838 = vst [vmem:[%s224 + $0x60] sm:$0xff] %v1774
      %1839 = vst.msk [vmem:[%s224 + $0x68] sm:$0xff] %vm289, %v1775
      %1840 = vst [vmem:[%s224 + $0x70] sm:$0xff] %v1776
      %1841 = vst.msk [vmem:[%s224 + $0x78] sm:$0xff] %vm289, %v1777
      %1842 = vst [vmem:[%s224 + $0x80] sm:$0xff] %v1778
      %1843 = vst.msk [vmem:[%s224 + $0x88] sm:$0xff] %vm289, %v1779
      %1844 = vst [vmem:[%s224 + $0x90] sm:$0xff] %v1780
      %1845 = vst.msk [vmem:[%s224 + $0x98] sm:$0xff] %vm289, %v1781
      %1846 = vst [vmem:[%s224 + $0xa0] sm:$0xff] %v1782
      %1847 = vst.msk [vmem:[%s224 + $0xa8] sm:$0xff] %vm289, %v1783
      %1848 = vst [vmem:[%s224 + $0xb0] sm:$0xff] %v1784
      %1849 = vst.msk [vmem:[%s224 + $0xb8] sm:$0xff] %vm289, %v1785
      %1850 = vst [vmem:[%s224 + $0xc0] sm:$0xff] %v1786
      %1851 = vst.msk [vmem:[%s224 + $0xc8] sm:$0xff] %vm289, %v1787
      %1852 = vst [vmem:[%s224 + $0xd0] sm:$0xff] %v1788
      %1853 = vst.msk [vmem:[%s224 + $0xd8] sm:$0xff] %vm289, %v1789
      %1854 = vst [vmem:[%s224 + $0xe0] sm:$0xff] %v1790
      %1855 = vst.msk [vmem:[%s224 + $0xe8] sm:$0xff] %vm289, %v1791
      %1856 = vst [vmem:[%s224 + $0xf0] sm:$0xff] %v1792
      %1857 = vst.msk [vmem:[%s224 + $0xf8] sm:$0xff] %vm289, %v1793
      %1858 = vst [vmem:[%s224 + $0x100] sm:$0xff] %v1794
      %1859 = vst.msk [vmem:[%s224 + $0x108] sm:$0xff] %vm289, %v1795
      %1860 = vst [vmem:[%s224 + $0x110] sm:$0xff] %v1796
      %1861 = vst.msk [vmem:[%s224 + $0x118] sm:$0xff] %vm289, %v1797
      %1862 = vst [vmem:[%s224 + $0x120] sm:$0xff] %v1798
      %1863 = vst.msk [vmem:[%s224 + $0x128] sm:$0xff] %vm289, %v1799
      %1864 = vst [vmem:[%s224 + $0x130] sm:$0xff] %v1800
      %1865 = vst.msk [vmem:[%s224 + $0x138] sm:$0xff] %vm289, %v1801
      %1866 = vst [vmem:[%s224 + $0x140] sm:$0xff] %v1802
      %1867 = vst.msk [vmem:[%s224 + $0x148] sm:$0xff] %vm289, %v1803
      %1868 = vst [vmem:[%s224 + $0x150] sm:$0xff] %v1804
      %1869 = vst.msk [vmem:[%s224 + $0x158] sm:$0xff] %vm289, %v1805
      %1870 = vst [vmem:[%s224 + $0x160] sm:$0xff] %v1806
      %1871 = vst.msk [vmem:[%s224 + $0x168] sm:$0xff] %vm289, %v1807
      %1872 = vst [vmem:[%s224 + $0x170] sm:$0xff] %v1808
      %1873 = vst.msk [vmem:[%s224 + $0x178] sm:$0xff] %vm289, %v1809
      %1874 = vst [vmem:[%s224 + $0x180] sm:$0xff] %v1810
      %1875 = vst.msk [vmem:[%s224 + $0x188] sm:$0xff] %vm289, %v1811
      %1876 = vst [vmem:[%s224 + $0x190] sm:$0xff] %v1812
      %1877 = vst.msk [vmem:[%s224 + $0x198] sm:$0xff] %vm289, %v1813
      %1878 = vst [vmem:[%s224 + $0x1a0] sm:$0xff] %v1814
      %1879 = vst.msk [vmem:[%s224 + $0x1a8] sm:$0xff] %vm289, %v1815
      %1880 = vst [vmem:[%s224 + $0x1b0] sm:$0xff] %v1816
      %1881 = vst.msk [vmem:[%s224 + $0x1b8] sm:$0xff] %vm289, %v1817
      %1882 = vst [vmem:[%s224 + $0x1c0] sm:$0xff] %v1818
      %1883 = vst.msk [vmem:[%s224 + $0x1c8] sm:$0xff] %vm289, %v1819
      %1884 = vst [vmem:[%s224 + $0x1d0] sm:$0xff] %v1820
      %1885 = vst.msk [vmem:[%s224 + $0x1d8] sm:$0xff] %vm289, %v1821
      %1886 = vst [vmem:[%s224 + $0x1e0] sm:$0xff] %v1822
      %1887 = vst.msk [vmem:[%s224 + $0x1e8] sm:$0xff] %vm289, %v1823
      %1888 = vst [vmem:[%s224 + $0x1f0] sm:$0xff] %v1824
      %1889 = vst.msk [vmem:[%s224 + $0x1f8] sm:$0xff] %vm289, %v1825
      %p1890 = scmp.lt.s32.totalorder %s16, 1
      %s1891 = scalar_select %p1890, %s16, 1
      %s1892 = smul.addr %s1891, 64
      %s1893 = smul.addr %s1892, 8
      %s1894 = scalar_lea.vmem %s5, %s1893
      // Predicated region
      $region41: #{channel_gate.1} parent=39 // pred_check
        %p1895 = pneg %p144
      $region42: #{channel_gate.1} parent=39 // pred_check_branch
        %1897 = sbr.rel (%p1895) target = $region44
      $region43: #{channel_gate.1} parent=39 // pred_region
        _
      $region44: #{channel_gate.1} parent=39 // pred_fallthru
        _
    $region40: #{channel_gate.1} parent=5 // pred_fallthru
      _
    %p1898 = scmp.le.s32.totalorder 2, %s11
    // Predicated region
    $region45: #{channel_gate.1} parent=5 // pred_check
      %p1899 = pneg %p1898
    $region46: #{channel_gate.1} parent=5 // pred_check_branch
      %1901 = sbr.rel (%p1899) target = $region48
    $region47: #{channel_gate.1} parent=5 // pred_region
      %s1902 = ssub.s32 %s11, 2
      // Predicated region
      $region49: #{channel_gate.1} parent=47 // pred_check
        %p1903 = pneg %p150
      $region50: #{channel_gate.1} parent=47 // pred_check_branch
        %1905 = sbr.rel (%p1903) target = $region52
      $region51: #{channel_gate.1} parent=47 // pred_region
        %p1906 = scmp.lt.s32.totalorder %s17, 1
        %s1907 = scalar_select %p1906, %s17, 1
        %s1908 = smul.addr %s1907, 64
        %s1909 = smul.addr %s1908, 8
        %s1910 = scalar_lea.vmem %s5, %s1909
      $region52: #{channel_gate.1} parent=47 // pred_fallthru
        _
    $region48: #{channel_gate.1} parent=5 // pred_fallthru
      _
  $region6: #{channel_gate.1} parent=0 // loop_footer
    %s15 = sadd.s32 1, %s11
  $region7: #{channel_gate.1} parent=0 // loop_footer_branch
    %10 = sbr.rel target = $region3
  $region8: #{channel_gate.1} parent=0 // loop_exit
    _

</llo_original>
